<compile_context>
chip_gen: v7x
topology: tpu7x:2x2x1
jax: 0.10.0
libtpu: 0.0.40
codegen_flags: <defaults>
</compile_context>

<pallas_src>
import functools

import jax
import jax.numpy as jnp
from jax.experimental import pallas as pl
from jax.experimental.pallas import tpu as pltpu


def _mha_kernel(q_ref, k_ref, v_ref,
                wq_ref, wk_ref, wv_ref, wo_ref, bo_ref,
                o_ref,
                *, heads, dim_head, scale):
    # Per-batch tiles (grid over batch; block dim 0 has size 1).
    q = q_ref[0]            # (N, dim)
    k = k_ref[0]            # (N, dim)
    v = v_ref[0]            # (N, dim)
    N = q.shape[0]

    # Input projections: full-width, lane-dense MXU matmuls -> (N, inner).
    # Scale folded into Q (N*inner VALU ops, not heads*N*N on the scores).
    Q = jnp.dot(q, wq_ref[...], preferred_element_type=jnp.float32) * scale
    K = jnp.dot(k, wk_ref[...], preferred_element_type=jnp.float32)
    V = jnp.dot(v, wv_ref[...], preferred_element_type=jnp.float32)

    # (N, inner) -> (heads, N, dh): one relayout per tensor; every subsequent
    # matmul is head-batched (leading batch dim), keeping the MXU back-to-back.
    def to_heads(t):
        return jnp.transpose(t.reshape(N, heads, dim_head), (1, 0, 2))

    Qh, Kh, Vh = to_heads(Q), to_heads(K), to_heads(V)

    # Head-batched scores: (heads, N, N).
    scores = jnp.einsum('hnd,hmd->hnm', Qh, Kh,
                        preferred_element_type=jnp.float32)

    # Softmax over keys (f32, max-subtracted); reciprocal goes to the EUP.
    m = jnp.max(scores, axis=-1, keepdims=True)
    e = jnp.exp(scores - m)
    s = jnp.sum(e, axis=-1, keepdims=True)
    attn = e * pl.reciprocal(s, approx=True)

    # Head-batched attn @ V: (heads, N, dh).
    Oh = jnp.einsum('hnm,hmd->hnd', attn, Vh,
                    preferred_element_type=jnp.float32)

    # Output projection without a concat scratch:
    # per-head (N,dh)@(dh,dim), summed over heads == concat(heads) @ Wo.
    out_h = jnp.einsum('hnd,hde->hne', Oh, wo_ref[...],
                       preferred_element_type=jnp.float32)   # (heads, N, dim)
    out = jnp.sum(out_h, axis=0) + bo_ref[...]               # (N, dim) + (1, dim)

    # Dropout(p=0.0) on to_out is identity in the forward pass -> skipped.
    o_ref[0] = out.astype(o_ref.dtype)


def multi_h_atten(q, k, v, wq, wk, wv, wo, bo, *, heads, dim_head):
    B, N, dim = q.shape
    inner_dim = heads * dim_head
    scale = dim_head ** (-0.5)

    # Pre-shape Wo to (heads, dh, dim) so the kernel can do a head-batched
    # output projection (rows of Wo are ordered h*dh + d, matching 'b n (h d)').
    wo3 = wo.reshape(heads, dim_head, dim)

    kernel = functools.partial(_mha_kernel, heads=heads,
                               dim_head=dim_head, scale=scale)

    io_spec = pl.BlockSpec((1, N, dim), lambda b: (b, 0, 0))
    full = lambda shape: pl.BlockSpec(shape, lambda b: (0,) * len(shape))

    return pl.pallas_call(
        kernel,
        out_shape=jax.ShapeDtypeStruct((B, N, dim), q.dtype),
        grid_spec=pltpu.PrefetchScalarGridSpec(
            num_scalar_prefetch=0,
            grid=(B,),
            in_specs=[
                io_spec, io_spec, io_spec,                    # q, k, v
                full((dim, inner_dim)),                       # Wq
                full((dim, inner_dim)),                       # Wk
                full((dim, inner_dim)),                       # Wv
                full((heads, dim_head, dim)),                 # Wo (head-split)
                full((1, dim)),                               # bo
            ],
            out_specs=io_spec,
        ),
        compiler_params=pltpu.CompilerParams(
            dimension_semantics=("parallel",)),
    )(q, k, v, wq, wk, wv, wo3, bo)


def _reference(q, k, v, wq, wk, wv, wo, bo, *, heads, dim_head):
    B, N, dim = q.shape
    scale = dim_head ** (-0.5)
    Q = q @ wq
    K = k @ wk
    V = v @ wv

    def split(t):  # b n (h d) -> b h n d
        return t.reshape(B, N, heads, dim_head).transpose(0, 2, 1, 3)

    Qh, Kh, Vh = split(Q), split(K), split(V)
    dots = jnp.einsum('bhid,bhjd->bhij', Qh, Kh) * scale
    attn = jax.nn.softmax(dots, axis=-1)
    out = jnp.einsum('bhij,bhjd->bhid', attn, Vh)
    out = out.transpose(0, 2, 1, 3).reshape(B, N, heads * dim_head)
    return out @ wo + bo


if __name__ == "__main__":
    # Small shapes consistent with the module: dim=32, heads=4, dim_head=16.
    B, N, dim = 2, 8, 32
    heads, dim_head = 4, 16
    inner_dim = heads * dim_head

    key = jax.random.PRNGKey(0)
    kq, kk, kv, kwq, kwk, kwv, kwo, kbo = jax.random.split(key, 8)

    q = jax.random.normal(kq, (B, N, dim), dtype=jnp.float32)
    k = jax.random.normal(kk, (B, N, dim), dtype=jnp.float32)
    v = jax.random.normal(kv, (B, N, dim), dtype=jnp.float32)

    # Deterministic synthetic weights (nn.Linear shapes, bias only on to_out).
    wq = jax.random.normal(kwq, (dim, inner_dim), dtype=jnp.float32) * 0.1
    wk = jax.random.normal(kwk, (dim, inner_dim), dtype=jnp.float32) * 0.1
    wv = jax.random.normal(kwv, (dim, inner_dim), dtype=jnp.float32) * 0.1
    wo = jax.random.normal(kwo, (inner_dim, dim), dtype=jnp.float32) * 0.1
    bo = jax.random.normal(kbo, (1, dim), dtype=jnp.float32) * 0.1

    out = multi_h_atten(q, k, v, wq, wk, wv, wo, bo,
                        heads=heads, dim_head=dim_head)
    out = jax.block_until_ready(out)

    ref = _reference(q, k, v, wq, wk, wv, wo, bo,
                     heads=heads, dim_head=dim_head)
    assert out.shape == (B, N, dim)
    # Tolerance relaxed slightly vs. 1e-4 because the softmax denominator uses
    # the EUP approximate reciprocal (pl.reciprocal(approx=True)).
    assert jnp.allclose(out, ref, atol=1e-2, rtol=1e-2), "mismatch vs reference"

    print("KERNEL_OK")
</pallas_src>

<mosaic_0001>
module attributes {stable_mosaic.version = 11 : i64} {
  func.func @_mha_kernel(%arg0: i32, %arg1: memref<1x8x32xf32, #tpu.memory_space<vmem>>, %arg2: memref<1x8x32xf32, #tpu.memory_space<vmem>>, %arg3: memref<1x8x32xf32, #tpu.memory_space<vmem>>, %arg4: memref<32x64xf32, #tpu.memory_space<vmem>>, %arg5: memref<32x64xf32, #tpu.memory_space<vmem>>, %arg6: memref<32x64xf32, #tpu.memory_space<vmem>>, %arg7: memref<4x16x32xf32, #tpu.memory_space<vmem>>, %arg8: memref<1x32xf32, #tpu.memory_space<vmem>>, %arg9: memref<1x8x32xf32, #tpu.memory_space<vmem>>) attributes {dimension_semantics = [#tpu.dimension_semantics<parallel>], iteration_bounds = array<i64: 2>, scalar_prefetch = 0 : i64, scratch_operands = 0 : i64, tpu.core_type = #tpu.core_type<tc>, window_params = [{transform_indices = @transform_0, window_bounds = array<i64: 1, 8, 32>}, {transform_indices = @transform_1, window_bounds = array<i64: 1, 8, 32>}, {transform_indices = @transform_2, window_bounds = array<i64: 1, 8, 32>}, {pipeline_mode = #tpu.pipeline_mode<synchronous>, transform_indices = @transform_3, window_bounds = array<i64: 32, 64>}, {pipeline_mode = #tpu.pipeline_mode<synchronous>, transform_indices = @transform_4, window_bounds = array<i64: 32, 64>}, {pipeline_mode = #tpu.pipeline_mode<synchronous>, transform_indices = @transform_5, window_bounds = array<i64: 32, 64>}, {pipeline_mode = #tpu.pipeline_mode<synchronous>, transform_indices = @transform_6, window_bounds = array<i64: 4, 16, 32>}, {pipeline_mode = #tpu.pipeline_mode<synchronous>, transform_indices = @transform_7, window_bounds = array<i64: 1, 32>}, {transform_indices = @transform_8, window_bounds = array<i64: 1, 8, 32>}]} {
    %c0 = arith.constant 0 : index
    %c0_0 = arith.constant 0 : index
    %c0_1 = arith.constant 0 : index
    %0 = vector.load %arg1[%c0, %c0_0, %c0_1] : memref<1x8x32xf32, #tpu.memory_space<vmem>>, vector<1x8x32xf32>
    %1 = vector.shape_cast %0 : vector<1x8x32xf32> to vector<8x32xf32>
    %c0_2 = arith.constant 0 : index
    %c0_3 = arith.constant 0 : index
    %c0_4 = arith.constant 0 : index
    %2 = vector.load %arg2[%c0_2, %c0_3, %c0_4] : memref<1x8x32xf32, #tpu.memory_space<vmem>>, vector<1x8x32xf32>
    %3 = vector.shape_cast %2 : vector<1x8x32xf32> to vector<8x32xf32>
    %c0_5 = arith.constant 0 : index
    %c0_6 = arith.constant 0 : index
    %c0_7 = arith.constant 0 : index
    %4 = vector.load %arg3[%c0_5, %c0_6, %c0_7] : memref<1x8x32xf32, #tpu.memory_space<vmem>>, vector<1x8x32xf32>
    %5 = vector.shape_cast %4 : vector<1x8x32xf32> to vector<8x32xf32>
    %c0_8 = arith.constant 0 : index
    %c0_9 = arith.constant 0 : index
    %6 = vector.load %arg4[%c0_8, %c0_9] : memref<32x64xf32, #tpu.memory_space<vmem>>, vector<32x64xf32>
    %cst = arith.constant dense<0.000000e+00> : vector<8x64xf32>
    %7 = tpu.matmul %1, %6, %cst {dimension_numbers = #tpu.dot_dimension_numbers<[1], [0], [0], [1], [0, 0, 1, 1], [], []>} : vector<8x32xf32>, vector<32x64xf32>, vector<8x64xf32> -> vector<8x64xf32>
    %cst_10 = arith.constant 2.500000e-01 : f32
    %8 = vector.broadcast %cst_10 : f32 to vector<8x64xf32>
    %9 = arith.mulf %7, %8 : vector<8x64xf32>
    %c0_11 = arith.constant 0 : index
    %c0_12 = arith.constant 0 : index
    %10 = vector.load %arg5[%c0_11, %c0_12] : memref<32x64xf32, #tpu.memory_space<vmem>>, vector<32x64xf32>
    %cst_13 = arith.constant dense<0.000000e+00> : vector<8x64xf32>
    %11 = tpu.matmul %3, %10, %cst_13 {dimension_numbers = #tpu.dot_dimension_numbers<[1], [0], [0], [1], [0, 0, 1, 1], [], []>} : vector<8x32xf32>, vector<32x64xf32>, vector<8x64xf32> -> vector<8x64xf32>
    %c0_14 = arith.constant 0 : index
    %c0_15 = arith.constant 0 : index
    %12 = vector.load %arg6[%c0_14, %c0_15] : memref<32x64xf32, #tpu.memory_space<vmem>>, vector<32x64xf32>
    %cst_16 = arith.constant dense<0.000000e+00> : vector<8x64xf32>
    %13 = tpu.matmul %5, %12, %cst_16 {dimension_numbers = #tpu.dot_dimension_numbers<[1], [0], [0], [1], [0, 0, 1, 1], [], []>} : vector<8x32xf32>, vector<32x64xf32>, vector<8x64xf32> -> vector<8x64xf32>
    %14 = vector.shape_cast %9 : vector<8x64xf32> to vector<8x4x16xf32>
    %15 = tpu.transpose %14, [1, 0, 2] : vector<8x4x16xf32> -> vector<4x8x16xf32>
    %16 = vector.shape_cast %11 : vector<8x64xf32> to vector<8x4x16xf32>
    %17 = tpu.transpose %16, [1, 0, 2] : vector<8x4x16xf32> -> vector<4x8x16xf32>
    %18 = vector.shape_cast %13 : vector<8x64xf32> to vector<8x4x16xf32>
    %19 = tpu.transpose %18, [1, 0, 2] : vector<8x4x16xf32> -> vector<4x8x16xf32>
    "tpu.trace_start"() <{level = 10 : i32, message = "hnd,hmd->hnm"}> : () -> ()
    %cst_17 = arith.constant dense<0.000000e+00> : vector<4x8x8xf32>
    %20 = tpu.matmul %15, %17, %cst_17 {dimension_numbers = #tpu.dot_dimension_numbers<[2], [2], [1], [1], [0, 0, 0, 1, 1, 1], [0], [0]>} : vector<4x8x16xf32>, vector<4x8x16xf32>, vector<4x8x8xf32> -> vector<4x8x8xf32>
    "tpu.trace_stop"() : () -> ()
    %cst_18 = arith.constant dense<0xFF800000> : vector<4x8xf32>
    %21 = vector.multi_reduction <maximumf>, %20, %cst_18 [2] : vector<4x8x8xf32> to vector<4x8xf32>
    %22 = vector.shape_cast %21 : vector<4x8xf32> to vector<4x8x1xf32>
    %23 = vector.broadcast %22 : vector<4x8x1xf32> to vector<4x8x8xf32>
    %24 = arith.subf %20, %23 : vector<4x8x8xf32>
    %25 = math.exp %24 : vector<4x8x8xf32>
    %cst_19 = arith.constant dense<0.000000e+00> : vector<4x8xf32>
    %26 = vector.multi_reduction <add>, %25, %cst_19 [2] : vector<4x8x8xf32> to vector<4x8xf32>
    %27 = vector.shape_cast %26 : vector<4x8xf32> to vector<4x8x1xf32>
    %28 = tpu.reciprocal %27 {approx = true} : vector<4x8x1xf32> -> vector<4x8x1xf32>
    %29 = vector.broadcast %28 : vector<4x8x1xf32> to vector<4x8x8xf32>
    %30 = arith.mulf %25, %29 : vector<4x8x8xf32>
    "tpu.trace_start"() <{level = 10 : i32, message = "hnm,hmd->hnd"}> : () -> ()
    %cst_20 = arith.constant dense<0.000000e+00> : vector<4x8x16xf32>
    %31 = tpu.matmul %30, %19, %cst_20 {dimension_numbers = #tpu.dot_dimension_numbers<[2], [1], [1], [2], [0, 0, 0, 1, 1, 2], [0], [0]>} : vector<4x8x8xf32>, vector<4x8x16xf32>, vector<4x8x16xf32> -> vector<4x8x16xf32>
    "tpu.trace_stop"() : () -> ()
    %c0_21 = arith.constant 0 : index
    %c0_22 = arith.constant 0 : index
    %c0_23 = arith.constant 0 : index
    %32 = vector.load %arg7[%c0_21, %c0_22, %c0_23] : memref<4x16x32xf32, #tpu.memory_space<vmem>>, vector<4x16x32xf32>
    "tpu.trace_start"() <{level = 10 : i32, message = "hnd,hde->hne"}> : () -> ()
    %cst_24 = arith.constant dense<0.000000e+00> : vector<4x8x32xf32>
    %33 = tpu.matmul %31, %32, %cst_24 {dimension_numbers = #tpu.dot_dimension_numbers<[2], [1], [1], [2], [0, 0, 0, 1, 1, 2], [0], [0]>} : vector<4x8x16xf32>, vector<4x16x32xf32>, vector<4x8x32xf32> -> vector<4x8x32xf32>
    "tpu.trace_stop"() : () -> ()
    %cst_25 = arith.constant dense<0.000000e+00> : vector<8x32xf32>
    %34 = vector.multi_reduction <add>, %33, %cst_25 [0] : vector<4x8x32xf32> to vector<8x32xf32>
    %c0_26 = arith.constant 0 : index
    %c0_27 = arith.constant 0 : index
    %35 = vector.load %arg8[%c0_26, %c0_27] : memref<1x32xf32, #tpu.memory_space<vmem>>, vector<1x32xf32>
    %36 = vector.broadcast %35 : vector<1x32xf32> to vector<8x32xf32>
    %37 = arith.addf %34, %36 : vector<8x32xf32>
    %c0_28 = arith.constant 0 : index
    %c0_29 = arith.constant 0 : index
    %c0_30 = arith.constant 0 : index
    %38 = vector.load %arg9[%c0_28, %c0_29, %c0_30] : memref<1x8x32xf32, #tpu.memory_space<vmem>>, vector<1x8x32xf32>
    %39 = vector.shape_cast %38 : vector<1x8x32xf32> to vector<8x32xf32>
    %40 = vector.shape_cast %37 : vector<8x32xf32> to vector<1x8x32xf32>
    tpu.vector_store %arg9[%c0_28, %c0_29, %c0_30], %40 {strides = array<i32>} : memref<1x8x32xf32, #tpu.memory_space<vmem>>, vector<1x8x32xf32>,
    return
  }
  func.func @transform_0(%arg0: i32) -> (i32, i32, i32) {
    %c0_i32 = arith.constant 0 : i32
    %c0_i32_0 = arith.constant 0 : i32
    %c0_i32_1 = arith.constant 0 : i32
    return %arg0, %c0_i32, %c0_i32_0 : i32, i32, i32
  }
  func.func @transform_1(%arg0: i32) -> (i32, i32, i32) {
    %c0_i32 = arith.constant 0 : i32
    %c0_i32_0 = arith.constant 0 : i32
    %c0_i32_1 = arith.constant 0 : i32
    return %arg0, %c0_i32, %c0_i32_0 : i32, i32, i32
  }
  func.func @transform_2(%arg0: i32) -> (i32, i32, i32) {
    %c0_i32 = arith.constant 0 : i32
    %c0_i32_0 = arith.constant 0 : i32
    %c0_i32_1 = arith.constant 0 : i32
    return %arg0, %c0_i32, %c0_i32_0 : i32, i32, i32
  }
  func.func @transform_3(%arg0: i32) -> (i32, i32) {
    %c0_i32 = arith.constant 0 : i32
    %c0_i32_0 = arith.constant 0 : i32
    %c0_i32_1 = arith.constant 0 : i32
    return %c0_i32, %c0_i32_0 : i32, i32
  }
  func.func @transform_4(%arg0: i32) -> (i32, i32) {
    %c0_i32 = arith.constant 0 : i32
    %c0_i32_0 = arith.constant 0 : i32
    %c0_i32_1 = arith.constant 0 : i32
    return %c0_i32, %c0_i32_0 : i32, i32
  }
  func.func @transform_5(%arg0: i32) -> (i32, i32) {
    %c0_i32 = arith.constant 0 : i32
    %c0_i32_0 = arith.constant 0 : i32
    %c0_i32_1 = arith.constant 0 : i32
    return %c0_i32, %c0_i32_0 : i32, i32
  }
  func.func @transform_6(%arg0: i32) -> (i32, i32, i32) {
    %c0_i32 = arith.constant 0 : i32
    %c0_i32_0 = arith.constant 0 : i32
    %c0_i32_1 = arith.constant 0 : i32
    %c0_i32_2 = arith.constant 0 : i32
    return %c0_i32, %c0_i32_0, %c0_i32_1 : i32, i32, i32
  }
  func.func @transform_7(%arg0: i32) -> (i32, i32) {
    %c0_i32 = arith.constant 0 : i32
    %c0_i32_0 = arith.constant 0 : i32
    %c0_i32_1 = arith.constant 0 : i32
    return %c0_i32, %c0_i32_0 : i32, i32
  }
  func.func @transform_8(%arg0: i32) -> (i32, i32, i32) {
    %c0_i32 = arith.constant 0 : i32
    %c0_i32_0 = arith.constant 0 : i32
    %c0_i32_1 = arith.constant 0 : i32
    return %arg0, %c0_i32, %c0_i32_0 : i32, i32, i32
  }
}

</mosaic_0001>

<llo_original>
// kernel: tpu_custom_call.1
$region0: #{tpu_custom_call.1}
  #allocation0 [shape = 'u32[]', space=smem, size = 0x4, offset = 0x4, fixed_abs, tag = 'smem constant byte address 0x4 - core index']
  #allocation1 [shape = 'u32[144,128]{1,0:T(1,128)}', space=vmem, size = 0x12000, scoped, tag = 'internal scratch']
  %s0 = inlined_call_operand.hbm [shape: f32[2,8,32], index: 0, kind: input, shape index: {}]
  %s1 = inlined_call_operand.hbm [shape: f32[2,8,32], index: 1, kind: input, shape index: {}]
  %s2 = inlined_call_operand.hbm [shape: f32[2,8,32], index: 2, kind: input, shape index: {}]
  %s3 = inlined_call_operand.hbm [shape: f32[32,64], index: 3, kind: input, shape index: {}]
  %s4 = inlined_call_operand.hbm [shape: f32[32,64], index: 4, kind: input, shape index: {}]
  %s5 = inlined_call_operand.hbm [shape: f32[32,64], index: 5, kind: input, shape index: {}]
  %s6 = inlined_call_operand.hbm [shape: f32[4,16,32], index: 6, kind: input, shape index: {}]
  %s7 = inlined_call_operand.vmem [shape: f32[1,32], index: 7, kind: input, shape index: {}]
  %s8 = inlined_call_operand.hbm [shape: f32[2,8,32], index: 8, kind: output, shape index: {}]
  %s9 = sld [smem:[#allocation0]]
  $region93: #{tpu_custom_call.1} parent=0
    _
  %s11 = ssub.s32 1, %s9
  %s12 = scalar_select 0, %s11, %s9
  $region1: #{tpu_custom_call.1} parent=0
    #allocation2 [shape = 'u8[8192]{0}', space=vmem, size = 0x2000, scoped, tag = 'input window, operand 0']
    #allocation3 [shape = 's32[2]{0}', space=sflag, size = 0x8, scoped, tag = 'scoped memory for tpu_custom_call.1']
    #allocation4 [shape = 's32[2]{0}', space=sflag, size = 0x8, scoped, tag = 'scoped memory for tpu_custom_call.1']
    #allocation5 [shape = 'u8[8192]{0}', space=vmem, size = 0x2000, scoped, tag = 'input window, operand 1']
    #allocation6 [shape = 's32[2]{0}', space=sflag, size = 0x8, scoped, tag = 'scoped memory for tpu_custom_call.1']
    #allocation7 [shape = 'u8[8192]{0}', space=vmem, size = 0x2000, scoped, tag = 'input window, operand 2']
    #allocation8 [shape = 'u8[16384]{0}', space=vmem, size = 0x4000, scoped, tag = 'input window, operand 3, single buffered']
    #allocation9 [shape = 's32[1]{0}', space=sflag, size = 0x4, scoped, tag = 'scoped memory for tpu_custom_call.1']
    #allocation10 [shape = 'u8[16384]{0}', space=vmem, size = 0x4000, scoped, tag = 'input window, operand 4, single buffered']
    #allocation11 [shape = 'u8[16384]{0}', space=vmem, size = 0x4000, scoped, tag = 'input window, operand 5, single buffered']
    #allocation12 [shape = 's32[1]{0}', space=sflag, size = 0x4, scoped, tag = 'scoped memory for tpu_custom_call.1']
    #allocation13 [shape = 'u8[32768]{0}', space=vmem, size = 0x8000, scoped, tag = 'input window, operand 6, single buffered']
    #allocation14 [shape = 'u8[8192]{0}', space=vmem, size = 0x2000, scoped, tag = 'output window, operand 0']
    %13 = vsyncpa [#allocation3], 0
    %s14 = scalar_lea.sflag [#allocation3], 1
    %15 = vsyncpa %s14, 0
    %16 = vsyncpa [#allocation6], 0
    %s17 = scalar_lea.sflag [#allocation6], 1
    %18 = vsyncpa %s17, 0
    %19 = vsyncpa [#allocation9], 0
    %20 = vsyncpa [#allocation12], 0
    %21 = vsyncpa [#allocation4], 0
    %s22 = scalar_lea.sflag [#allocation4], 1
    %23 = vsyncpa %s22, 0
    loop: start=0, step=1, limit=4
    $region2: #{tpu_custom_call.1} parent=1 // loop_pre_header
      _
    $region3: #{tpu_custom_call.1} parent=1 // loop_header
      %s25 = sphi 0, %s29
      %p26 = scmp.ge.s32.totalorder %s25, 4
      %s35 = sphi 0, %s37
      %s38 = sphi 0, %s35
      %s39 = sphi 0, %s38
      %s55 = sphi 0, %s39
      %s61 = sphi 0, %s63
      %s64 = sphi 0, %s61
      %s65 = sphi 0, %s64
      %s81 = sphi 0, %s65
      %s87 = sphi 0, %s89
      %s90 = sphi 0, %s87
      %s91 = sphi 0, %s90
      %s107 = sphi 0, %s91
      %s111 = sphi 0, %s111
      %s113 = sphi 0, %s111
      %s114 = sphi 0, %s113
      %s128 = sphi 0, %s114
      %s132 = sphi 0, %s132
      %s134 = sphi 0, %s132
      %s135 = sphi 0, %s134
      %s149 = sphi 0, %s135
      %s153 = sphi 0, %s153
      %s155 = sphi 0, %s153
      %s156 = sphi 0, %s155
      %s170 = sphi 0, %s156
      %s174 = sphi 0, %s174
      %s176 = sphi 0, %s174
      %s177 = sphi 0, %s176
      %s191 = sphi 0, %s177
      %s195 = sphi 0, %s195
      %s197 = sphi 0, %s195
      %s198 = sphi 0, %s197
      %s212 = sphi 0, %s198
      %s218 = sphi 0, %s220
      %s221 = sphi 0, %s218
      %s222 = sphi 0, %s221
      %s238 = sphi 0, %s222
    $region4: #{tpu_custom_call.1} parent=1 // loop_header_branch
      %28 = sbr.rel (%p26) target = $region8
    $region5: #{tpu_custom_call.1} parent=1 // loop_body
      %s30 = ssub.s32 %s25, 1
      %s31 = ssub.s32 %s25, 2
      %s32 = sadd.s32 %s25, 1
      %s33 = ssub.s32 %s25, %s32
      %p34 = scmp.eq.s32.totalorder %s33, 0
      %s36 = sadd.s32 %s35, 1
      %s37 = scalar_select %p34, %s35, %s36
      %p40 = pneg %p34
      %p41 = scmp.eq.s32.totalorder %s25, 1
      %p42 = por %p40, %p41
      %p43 = scmp.ne.s32.totalorder %s35, %s38
      %p44 = scmp.eq.s32.totalorder %s25, 0
      %p45 = por %p43, %p44
      %p46 = scmp.ne.s32.totalorder %s35, %s38
      %p47 = scmp.eq.s32.totalorder %s30, 1
      %p48 = por %p46, %p47
      %p49 = scmp.ne.s32.totalorder %s38, %s39
      %p50 = scmp.eq.s32.totalorder %s30, 0
      %p51 = por %p49, %p50
      %p52 = scmp.ne.s32.totalorder %s38, %s39
      %p53 = scmp.eq.s32.totalorder %s31, 1
      %p54 = por %p52, %p53
      %p56 = scmp.ne.s32.totalorder %s39, %s55
      %p57 = scmp.eq.s32.totalorder %s31, 0
      %p58 = por %p56, %p57
      %s59 = ssub.s32 %s25, %s32
      %p60 = scmp.eq.s32.totalorder %s59, 0
      %s62 = sadd.s32 %s61, 1
      %s63 = scalar_select %p60, %s61, %s62
      %p66 = pneg %p60
      %p67 = scmp.eq.s32.totalorder %s25, 1
      %p68 = por %p66, %p67
      %p69 = scmp.ne.s32.totalorder %s61, %s64
      %p70 = scmp.eq.s32.totalorder %s25, 0
      %p71 = por %p69, %p70
      %p72 = scmp.ne.s32.totalorder %s61, %s64
      %p73 = scmp.eq.s32.totalorder %s30, 1
      %p74 = por %p72, %p73
      %p75 = scmp.ne.s32.totalorder %s64, %s65
      %p76 = scmp.eq.s32.totalorder %s30, 0
      %p77 = por %p75, %p76
      %p78 = scmp.ne.s32.totalorder %s64, %s65
      %p79 = scmp.eq.s32.totalorder %s31, 1
      %p80 = por %p78, %p79
      %p82 = scmp.ne.s32.totalorder %s65, %s81
      %p83 = scmp.eq.s32.totalorder %s31, 0
      %p84 = por %p82, %p83
      %s85 = ssub.s32 %s25, %s32
      %p86 = scmp.eq.s32.totalorder %s85, 0
      %s88 = sadd.s32 %s87, 1
      %s89 = scalar_select %p86, %s87, %s88
      %p92 = pneg %p86
      %p93 = scmp.eq.s32.totalorder %s25, 1
      %p94 = por %p92, %p93
      %p95 = scmp.ne.s32.totalorder %s87, %s90
      %p96 = scmp.eq.s32.totalorder %s25, 0
      %p97 = por %p95, %p96
      %p98 = scmp.ne.s32.totalorder %s87, %s90
      %p99 = scmp.eq.s32.totalorder %s30, 1
      %p100 = por %p98, %p99
      %p101 = scmp.ne.s32.totalorder %s90, %s91
      %p102 = scmp.eq.s32.totalorder %s30, 0
      %p103 = por %p101, %p102
      %p104 = scmp.ne.s32.totalorder %s90, %s91
      %p105 = scmp.eq.s32.totalorder %s31, 1
      %p106 = por %p104, %p105
      %p108 = scmp.ne.s32.totalorder %s91, %s107
      %p109 = scmp.eq.s32.totalorder %s31, 0
      %p110 = por %p108, %p109
      %s112 = sadd.s32 %s111, 1
      %p115 = scmp.eq.s32.totalorder %s25, 1
      %p116 = scmp.ne.s32.totalorder %s111, %s113
      %p117 = scmp.eq.s32.totalorder %s25, 0
      %p118 = por %p116, %p117
      %p119 = scmp.ne.s32.totalorder %s111, %s113
      %p120 = scmp.eq.s32.totalorder %s30, 1
      %p121 = por %p119, %p120
      %p122 = scmp.ne.s32.totalorder %s113, %s114
      %p123 = scmp.eq.s32.totalorder %s30, 0
      %p124 = por %p122, %p123
      %p125 = scmp.ne.s32.totalorder %s113, %s114
      %p126 = scmp.eq.s32.totalorder %s31, 1
      %p127 = por %p125, %p126
      %p129 = scmp.ne.s32.totalorder %s114, %s128
      %p130 = scmp.eq.s32.totalorder %s31, 0
      %p131 = por %p129, %p130
      %s133 = sadd.s32 %s132, 1
      %p136 = scmp.eq.s32.totalorder %s25, 1
      %p137 = scmp.ne.s32.totalorder %s132, %s134
      %p138 = scmp.eq.s32.totalorder %s25, 0
      %p139 = por %p137, %p138
      %p140 = scmp.ne.s32.totalorder %s132, %s134
      %p141 = scmp.eq.s32.totalorder %s30, 1
      %p142 = por %p140, %p141
      %p143 = scmp.ne.s32.totalorder %s134, %s135
      %p144 = scmp.eq.s32.totalorder %s30, 0
      %p145 = por %p143, %p144
      %p146 = scmp.ne.s32.totalorder %s134, %s135
      %p147 = scmp.eq.s32.totalorder %s31, 1
      %p148 = por %p146, %p147
      %p150 = scmp.ne.s32.totalorder %s135, %s149
      %p151 = scmp.eq.s32.totalorder %s31, 0
      %p152 = por %p150, %p151
      %s154 = sadd.s32 %s153, 1
      %p157 = scmp.eq.s32.totalorder %s25, 1
      %p158 = scmp.ne.s32.totalorder %s153, %s155
      %p159 = scmp.eq.s32.totalorder %s25, 0
      %p160 = por %p158, %p159
      %p161 = scmp.ne.s32.totalorder %s153, %s155
      %p162 = scmp.eq.s32.totalorder %s30, 1
      %p163 = por %p161, %p162
      %p164 = scmp.ne.s32.totalorder %s155, %s156
      %p165 = scmp.eq.s32.totalorder %s30, 0
      %p166 = por %p164, %p165
      %p167 = scmp.ne.s32.totalorder %s155, %s156
      %p168 = scmp.eq.s32.totalorder %s31, 1
      %p169 = por %p167, %p168
      %p171 = scmp.ne.s32.totalorder %s156, %s170
      %p172 = scmp.eq.s32.totalorder %s31, 0
      %p173 = por %p171, %p172
      %s175 = sadd.s32 %s174, 1
      %p178 = scmp.eq.s32.totalorder %s25, 1
      %p179 = scmp.ne.s32.totalorder %s174, %s176
      %p180 = scmp.eq.s32.totalorder %s25, 0
      %p181 = por %p179, %p180
      %p182 = scmp.ne.s32.totalorder %s174, %s176
      %p183 = scmp.eq.s32.totalorder %s30, 1
      %p184 = por %p182, %p183
      %p185 = scmp.ne.s32.totalorder %s176, %s177
      %p186 = scmp.eq.s32.totalorder %s30, 0
      %p187 = por %p185, %p186
      %p188 = scmp.ne.s32.totalorder %s176, %s177
      %p189 = scmp.eq.s32.totalorder %s31, 1
      %p190 = por %p188, %p189
      %p192 = scmp.ne.s32.totalorder %s177, %s191
      %p193 = scmp.eq.s32.totalorder %s31, 0
      %p194 = por %p192, %p193
      %s196 = sadd.s32 %s195, 1
      %p199 = scmp.eq.s32.totalorder %s25, 1
      %p200 = scmp.ne.s32.totalorder %s195, %s197
      %p201 = scmp.eq.s32.totalorder %s25, 0
      %p202 = por %p200, %p201
      %p203 = scmp.ne.s32.totalorder %s195, %s197
      %p204 = scmp.eq.s32.totalorder %s30, 1
      %p205 = por %p203, %p204
      %p206 = scmp.ne.s32.totalorder %s197, %s198
      %p207 = scmp.eq.s32.totalorder %s30, 0
      %p208 = por %p206, %p207
      %p209 = scmp.ne.s32.totalorder %s197, %s198
      %p210 = scmp.eq.s32.totalorder %s31, 1
      %p211 = por %p209, %p210
      %p213 = scmp.ne.s32.totalorder %s198, %s212
      %p214 = scmp.eq.s32.totalorder %s31, 0
      %p215 = por %p213, %p214
      %s216 = ssub.s32 %s25, %s32
      %p217 = scmp.eq.s32.totalorder %s216, 0
      %s219 = sadd.s32 %s218, 1
      %s220 = scalar_select %p217, %s218, %s219
      %p223 = pneg %p217
      %p224 = scmp.eq.s32.totalorder %s25, 1
      %p225 = por %p223, %p224
      %p226 = scmp.ne.s32.totalorder %s218, %s221
      %p227 = scmp.eq.s32.totalorder %s25, 0
      %p228 = por %p226, %p227
      %p229 = scmp.ne.s32.totalorder %s218, %s221
      %p230 = scmp.eq.s32.totalorder %s30, 1
      %p231 = por %p229, %p230
      %p232 = scmp.ne.s32.totalorder %s221, %s222
      %p233 = scmp.eq.s32.totalorder %s30, 0
      %p234 = por %p232, %p233
      %p235 = scmp.ne.s32.totalorder %s221, %s222
      %p236 = scmp.eq.s32.totalorder %s31, 1
      %p237 = por %p235, %p236
      %p239 = scmp.ne.s32.totalorder %s222, %s238
      %p240 = scmp.eq.s32.totalorder %s31, 0
      %p241 = por %p239, %p240
      %p242 = scmp.le.s32.totalorder 1, %s25
      %p243 = scmp.lt.s32.totalorder %s25, 3
      %p244 = pnand %p242, %p243
      %p245 = pneg %p244
      // Predicated region
      $region9: #{tpu_custom_call.1} parent=5 // pred_check
        _
      $region10: #{tpu_custom_call.1} parent=5 // pred_check_branch
        %247 = sbr.rel (%p244) target = $region12
      $region11: #{tpu_custom_call.1} parent=5 // pred_region
        %s248 = ssub.s32 %s25, 1
        // Predicated region
        $region13: #{tpu_custom_call.1} parent=11 // pred_check
          %p249 = pneg %p124
        $region14: #{tpu_custom_call.1} parent=11 // pred_check_branch
          %251 = sbr.rel (%p249) target = $region16
        $region15: #{tpu_custom_call.1} parent=11 // pred_region
          %s253 = ssub.s32 512, 512
          %254 = vsyncadd [#allocation9], %s253
          %s255 = sshll.u32 [#allocation8], 4
          %s256 = int_to_ptr.vmem [resolvable:$true] %s255
          %261 = dma.hbm_to_vmem [thread:$0]  %s3, 512, %s256, [#allocation9], 128, 128, 8
        $region16: #{tpu_custom_call.1} parent=11 // pred_fallthru
          _
        // Predicated region
        $region17: #{tpu_custom_call.1} parent=11 // pred_check
          %p262 = pneg %p145
        $region18: #{tpu_custom_call.1} parent=11 // pred_check_branch
          %264 = sbr.rel (%p262) target = $region20
        $region19: #{tpu_custom_call.1} parent=11 // pred_region
          %s266 = ssub.s32 512, 512
          %267 = vsyncadd [#allocation9], %s266
          %s268 = sshll.u32 [#allocation10], 4
          %s269 = int_to_ptr.vmem [resolvable:$true] %s268
          %274 = dma.hbm_to_vmem [thread:$0]  %s4, 512, %s269, [#allocation9], 128, 128, 8
        $region20: #{tpu_custom_call.1} parent=11 // pred_fallthru
          _
        // Predicated region
        $region21: #{tpu_custom_call.1} parent=11 // pred_check
          %p275 = pneg %p166
        $region22: #{tpu_custom_call.1} parent=11 // pred_check_branch
          %277 = sbr.rel (%p275) target = $region24
        $region23: #{tpu_custom_call.1} parent=11 // pred_region
          %s279 = ssub.s32 512, 512
          %280 = vsyncadd [#allocation12], %s279
          %s281 = sshll.u32 [#allocation11], 4
          %s282 = int_to_ptr.vmem [resolvable:$true] %s281
          %287 = dma.hbm_to_vmem [thread:$0]  %s5, 512, %s282, [#allocation12], 128, 128, 8
        $region24: #{tpu_custom_call.1} parent=11 // pred_fallthru
          _
        // Predicated region
        $region25: #{tpu_custom_call.1} parent=11 // pred_check
          %p288 = pneg %p187
        $region26: #{tpu_custom_call.1} parent=11 // pred_check_branch
          %290 = sbr.rel (%p288) target = $region28
        $region27: #{tpu_custom_call.1} parent=11 // pred_region
          %s292 = ssub.s32 1024, 1024
          %293 = vsyncadd [#allocation12], %s292
          %s294 = sshll.u32 [#allocation13], 4
          %s295 = int_to_ptr.vmem [resolvable:$true] %s294
          %300 = dma.hbm_to_vmem [thread:$0]  %s6, 1024, %s295, [#allocation12], 128, 128, 8
        $region28: #{tpu_custom_call.1} parent=11 // pred_fallthru
          _
        // Predicated region
        $region29: #{tpu_custom_call.1} parent=11 // pred_check
          %p301 = pneg %p208
        $region30: #{tpu_custom_call.1} parent=11 // pred_check_branch
          %303 = sbr.rel (%p301) target = $region32
        $region31: #{tpu_custom_call.1} parent=11 // pred_region
          _
        $region32: #{tpu_custom_call.1} parent=11 // pred_fallthru
          _
      $region12: #{tpu_custom_call.1} parent=5 // pred_fallthru
        _
      %p304 = scmp.lt.s32.totalorder %s25, 2
      // Predicated region
      $region33: #{tpu_custom_call.1} parent=5 // pred_check
        %p305 = pneg %p304
      $region34: #{tpu_custom_call.1} parent=5 // pred_check_branch
        %307 = sbr.rel (%p305) target = $region36
      $region35: #{tpu_custom_call.1} parent=5 // pred_region
        // Predicated region
        $region37: #{tpu_custom_call.1} parent=35 // pred_check
          %p308 = pneg %p45
        $region38: #{tpu_custom_call.1} parent=35 // pred_check_branch
          %310 = sbr.rel (%p308) target = $region40
        $region39: #{tpu_custom_call.1} parent=35 // pred_region
          %s311 = sand.u32 %s35, 1
          %s312 = scalar_lea.sflag [#allocation3], %s311
          %s313 = sand.u32 %s35, 1
          %s314 = smul.addr %s313, 8
          %s315 = scalar_lea.vmem [#allocation2], %s314
          %s317 = ssub.s32 128, 128
          %318 = vsyncadd %s312, %s317
          %s319 = smul.addr %s25, 128
          %s320 = scalar_lea.hbm %s0, %s319
          %s322 = sshll.u32 %s315, 4
          %s323 = int_to_ptr.vmem [resolvable:$true] %s322
          %325 = dma.hbm_to_vmem [thread:$0]  %s320, 128, %s323, %s312
        $region40: #{tpu_custom_call.1} parent=35 // pred_fallthru
          _
        // Predicated region
        $region41: #{tpu_custom_call.1} parent=35 // pred_check
          %p326 = pneg %p71
        $region42: #{tpu_custom_call.1} parent=35 // pred_check_branch
          %328 = sbr.rel (%p326) target = $region44
        $region43: #{tpu_custom_call.1} parent=35 // pred_region
          %s329 = sand.u32 %s25, 1
          %s330 = scalar_lea.sflag [#allocation6], %s329
          %s331 = sand.u32 %s61, 1
          %s332 = smul.addr %s331, 8
          %s333 = scalar_lea.vmem [#allocation5], %s332
          %s335 = ssub.s32 128, 128
          %336 = vsyncadd %s330, %s335
          %s337 = smul.addr %s25, 128
          %s338 = scalar_lea.hbm %s1, %s337
          %s340 = sshll.u32 %s333, 4
          %s341 = int_to_ptr.vmem [resolvable:$true] %s340
          %343 = dma.hbm_to_vmem [thread:$0]  %s338, 128, %s341, %s330
        $region44: #{tpu_custom_call.1} parent=35 // pred_fallthru
          _
        // Predicated region
        $region45: #{tpu_custom_call.1} parent=35 // pred_check
          %p344 = pneg %p97
        $region46: #{tpu_custom_call.1} parent=35 // pred_check_branch
          %346 = sbr.rel (%p344) target = $region48
        $region47: #{tpu_custom_call.1} parent=35 // pred_region
          %s347 = sand.u32 %s25, 1
          %s348 = scalar_lea.sflag [#allocation6], %s347
          %s349 = sand.u32 %s87, 1
          %s350 = smul.addr %s349, 8
          %s351 = scalar_lea.vmem [#allocation7], %s350
          %s353 = ssub.s32 128, 128
          %354 = vsyncadd %s348, %s353
          %s355 = smul.addr %s25, 128
          %s356 = scalar_lea.hbm %s2, %s355
          %s358 = sshll.u32 %s351, 4
          %s359 = int_to_ptr.vmem [resolvable:$true] %s358
          %361 = dma.hbm_to_vmem [thread:$0]  %s356, 128, %s359, %s348
        $region48: #{tpu_custom_call.1} parent=35 // pred_fallthru
          _
      $region36: #{tpu_custom_call.1} parent=5 // pred_fallthru
        _
      %p362 = scmp.le.s32.totalorder 1, %s25
      %p363 = scmp.lt.s32.totalorder %s25, 3
      %p364 = pnand %p362, %p363
      %p365 = pneg %p364
      // Predicated region
      $region49: #{tpu_custom_call.1} parent=5 // pred_check
        _
      $region50: #{tpu_custom_call.1} parent=5 // pred_check_branch
        %367 = sbr.rel (%p364) target = $region52
      $region51: #{tpu_custom_call.1} parent=5 // pred_region
        %s368 = ssub.s32 %s25, 1
        %s369 = sand.u32 %s38, 1
        %s370 = scalar_lea.sflag [#allocation3], %s369
        %s371 = sand.u32 %s38, 1
        %s372 = smul.addr %s371, 8
        %s373 = scalar_lea.vmem [#allocation2], %s372
        // Predicated region
        $region53: #{tpu_custom_call.1} parent=51 // pred_check
          %p374 = pneg %p51
        $region54: #{tpu_custom_call.1} parent=51 // pred_check_branch
          %376 = sbr.rel (%p374) target = $region56
        $region55: #{tpu_custom_call.1} parent=51 // pred_region
          %377 = dma.done %s370, 128
        $region56: #{tpu_custom_call.1} parent=51 // pred_fallthru
          _
        %s378 = sand.u32 %s30, 1
        %s379 = scalar_lea.sflag [#allocation6], %s378
        %s380 = sand.u32 %s64, 1
        %s381 = smul.addr %s380, 8
        %s382 = scalar_lea.vmem [#allocation5], %s381
        // Predicated region
        $region57: #{tpu_custom_call.1} parent=51 // pred_check
          %p383 = pneg %p77
        $region58: #{tpu_custom_call.1} parent=51 // pred_check_branch
          %385 = sbr.rel (%p383) target = $region60
        $region59: #{tpu_custom_call.1} parent=51 // pred_region
          %386 = dma.done %s379, 128
        $region60: #{tpu_custom_call.1} parent=51 // pred_fallthru
          _
        %s387 = sand.u32 %s30, 1
        %s388 = scalar_lea.sflag [#allocation6], %s387
        %s389 = sand.u32 %s90, 1
        %s390 = smul.addr %s389, 8
        %s391 = scalar_lea.vmem [#allocation7], %s390
        // Predicated region
        $region61: #{tpu_custom_call.1} parent=51 // pred_check
          %p392 = pneg %p103
        $region62: #{tpu_custom_call.1} parent=51 // pred_check_branch
          %394 = sbr.rel (%p392) target = $region64
        $region63: #{tpu_custom_call.1} parent=51 // pred_region
          %395 = dma.done %s388, 128
        $region64: #{tpu_custom_call.1} parent=51 // pred_fallthru
          _
        // Predicated region
        $region65: #{tpu_custom_call.1} parent=51 // pred_check
          %p396 = pneg %p124
        $region66: #{tpu_custom_call.1} parent=51 // pred_check_branch
          %398 = sbr.rel (%p396) target = $region68
        $region67: #{tpu_custom_call.1} parent=51 // pred_region
          %399 = dma.done [#allocation9], 512
        $region68: #{tpu_custom_call.1} parent=51 // pred_fallthru
          _
        // Predicated region
        $region69: #{tpu_custom_call.1} parent=51 // pred_check
          %p400 = pneg %p145
        $region70: #{tpu_custom_call.1} parent=51 // pred_check_branch
          %402 = sbr.rel (%p400) target = $region72
        $region71: #{tpu_custom_call.1} parent=51 // pred_region
          %403 = dma.done [#allocation9], 512
        $region72: #{tpu_custom_call.1} parent=51 // pred_fallthru
          _
        // Predicated region
        $region73: #{tpu_custom_call.1} parent=51 // pred_check
          %p404 = pneg %p166
        $region74: #{tpu_custom_call.1} parent=51 // pred_check_branch
          %406 = sbr.rel (%p404) target = $region76
        $region75: #{tpu_custom_call.1} parent=51 // pred_region
          %407 = dma.done [#allocation12], 512
        $region76: #{tpu_custom_call.1} parent=51 // pred_fallthru
          _
        // Predicated region
        $region77: #{tpu_custom_call.1} parent=51 // pred_check
          %p408 = pneg %p187
        $region78: #{tpu_custom_call.1} parent=51 // pred_check_branch
          %410 = sbr.rel (%p408) target = $region80
        $region79: #{tpu_custom_call.1} parent=51 // pred_region
          %411 = dma.done [#allocation12], 1024
        $region80: #{tpu_custom_call.1} parent=51 // pred_fallthru
          _
        %s412 = sand.u32 %s38, 1
        %s413 = scalar_lea.sflag [#allocation3], %s412
        %s414 = sand.u32 %s38, 1
        %s415 = smul.addr %s414, 8
        %s416 = scalar_lea.vmem [#allocation2], %s415
        %p417 = pneg %p51
        %p418 = pneg %p48
        %s419 = sand.u32 %s30, 1
        %s420 = scalar_lea.sflag [#allocation6], %s419
        %s421 = sand.u32 %s64, 1
        %s422 = smul.addr %s421, 8
        %s423 = scalar_lea.vmem [#allocation5], %s422
        %p424 = pneg %p77
        %p425 = pneg %p74
        %s426 = sand.u32 %s30, 1
        %s427 = scalar_lea.sflag [#allocation6], %s426
        %s428 = sand.u32 %s90, 1
        %s429 = smul.addr %s428, 8
        %s430 = scalar_lea.vmem [#allocation7], %s429
        %p431 = pneg %p103
        %p432 = pneg %p100
        %p433 = pneg %p124
        %p434 = pneg %p121
        %p435 = pneg %p145
        %p436 = pneg %p142
        %p437 = pneg %p166
        %p438 = pneg %p163
        %p439 = pneg %p187
        %p440 = pneg %p184
        %p441 = pneg %p208
        %p442 = pneg %p205
        %p443 = pneg %p234
        %p444 = pneg %p231
        %s445 = sand.u32 %s221, 1
        %s446 = scalar_lea.sflag [#allocation4], %s445
        %s447 = sand.u32 %s221, 1
        %s448 = smul.addr %s447, 8
        %s449 = scalar_lea.vmem [#allocation14], %s448
        %v450 = vld [vmem:[%s373] sm:$0xff]
        %v451 = vld [vmem:[%s382] sm:$0xff]
        %v452 = vld [vmem:[%s391] sm:$0xff]
        %v453 = vld [vmem:[#allocation8] sm:$0xff]
        %v454 = vld [vmem:[#allocation8 + $0x8] sm:$0xff]
        %v455 = vld [vmem:[#allocation8 + $0x10] sm:$0xff]
        %v456 = vld [vmem:[#allocation8 + $0x18] sm:$0xff]
        %vm457 = vcmask 261120
        %v459 = vsel %vm457, %v450, 0
        %461 = vmatprep.subr.mxu0 0.0
        %462 = vmatpush1.msra.mxu0 %v453
        %463 = vmatprep.subr.mxu0 0.0
        %464 = vmatpush1.msra.mxu0 %v454
        %465 = vmatprep.subr.mxu0 0.0
        %466 = vmatpush1.msra.mxu0 %v455
        %467 = vmatprep.subr.mxu0 0.0
        %468 = vmatpush1.msra.mxu0 %v456
        %469 = vmatprep.subr.mxu0 0.0
        %470 = vmatpush1.msra.mxu0 0.0
        %471 = vmatprep.subr.mxu0 0.0
        %472 = vmatpush1.msra.mxu0 0.0
        %473 = vmatprep.subr.mxu0 0.0
        %474 = vmatpush1.msra.mxu0 0.0
        %475 = vmatprep.subr.mxu0 0.0
        %476 = vmatpush1.msra.mxu0 0.0
        %477 = vmatprep.subr.mxu0 0.0
        %478 = vmatpush1.msra.mxu0 0.0
        %479 = vmatprep.subr.mxu0 0.0
        %480 = vmatpush1.msra.mxu0 0.0
        %481 = vmatprep.subr.mxu0 0.0
        %482 = vmatpush1.msra.mxu0 0.0
        %483 = vmatprep.subr.mxu0 0.0
        %484 = vmatpush1.msra.mxu0 0.0
        %485 = vmatprep.subr.mxu0 0.0
        %486 = vmatpush1.msra.mxu0 0.0
        %487 = vmatprep.subr.mxu0 0.0
        %488 = vmatpush1.msra.mxu0 0.0
        %489 = vmatprep.subr.mxu0 0.0
        %490 = vmatpush1.msra.mxu0 0.0
        %491 = vmatprep.subr.mxu0 0.0
        %492 = vmatpush1.msra.mxu0 0.0
        %493 = vmatprep.subr.mxu0 0.0
        %494 = vmatpush1.msra.mxu0 0.0
        %495 = vmatprep.subr.mxu0 0.0
        %496 = vmatpush1.msra.mxu0 0.0
        %497 = vmatprep.subr.mxu0 0.0
        %498 = vmatpush1.msra.mxu0 0.0
        %499 = vmatprep.subr.mxu0 0.0
        %500 = vmatpush1.msra.mxu0 0.0
        %501 = vmatprep.subr.mxu0 0.0
        %502 = vmatpush1.msra.mxu0 0.0
        %503 = vmatprep.subr.mxu0 0.0
        %504 = vmatpush1.msra.mxu0 0.0
        %505 = vmatprep.subr.mxu0 0.0
        %506 = vmatpush1.msra.mxu0 0.0
        %507 = vmatprep.subr.mxu0 0.0
        %508 = vmatpush1.msra.mxu0 0.0
        %509 = vmatprep.subr.mxu0 0.0
        %510 = vmatpush1.msra.mxu0 0.0
        %511 = vmatprep.subr.mxu0 0.0
        %512 = vmatpush1.msra.mxu0 0.0
        %513 = vmatprep.subr.mxu0 0.0
        %514 = vmatpush1.msra.mxu0 0.0
        %515 = vmatprep.subr.mxu0 0.0
        %516 = vmatpush1.msra.mxu0 0.0
        %517 = vmatprep.subr.mxu0 0.0
        %518 = vmatpush1.msra.mxu0 0.0
        %519 = vmatprep.subr.mxu0 0.0
        %520 = vmatpush1.msra.mxu0 0.0
        %521 = vmatprep.subr.mxu0 0.0
        %522 = vmatpush1.msra.mxu0 0.0
        %523 = vmatprep.subr.mxu0 0.0
        %524 = vmatpush1.msra.mxu0 0.0
        %525 = vmatprep.mubr.f32.mxu0 0.0
        %526 = vmatmul.mubr.f32.gmra.mrb[0].mxu0 %v459
        %v527 = vpop.f32.mrb[0].mxu0
        %v528 = vadd.f32 0.0, %v527
        %v529 = vpop.f32.mrb[0].mxu0
        %530 = vdwg.mxu0
        %v531 = vmul.f32 %v528, 0.25
        %v532 = vld [vmem:[#allocation10] sm:$0xff]
        %v533 = vld [vmem:[#allocation10 + $0x8] sm:$0xff]
        %v534 = vld [vmem:[#allocation10 + $0x10] sm:$0xff]
        %v535 = vld [vmem:[#allocation10 + $0x18] sm:$0xff]
        %v537 = vsel %vm457, %v451, 0
        %539 = vmatprep.subr.mxu0 0.0
        %540 = vmatpush1.msra.mxu0 %v532
        %541 = vmatprep.subr.mxu0 0.0
        %542 = vmatpush1.msra.mxu0 %v533
        %543 = vmatprep.subr.mxu0 0.0
        %544 = vmatpush1.msra.mxu0 %v534
        %545 = vmatprep.subr.mxu0 0.0
        %546 = vmatpush1.msra.mxu0 %v535
        %547 = vmatprep.subr.mxu0 0.0
        %548 = vmatpush1.msra.mxu0 0.0
        %549 = vmatprep.subr.mxu0 0.0
        %550 = vmatpush1.msra.mxu0 0.0
        %551 = vmatprep.subr.mxu0 0.0
        %552 = vmatpush1.msra.mxu0 0.0
        %553 = vmatprep.subr.mxu0 0.0
        %554 = vmatpush1.msra.mxu0 0.0
        %555 = vmatprep.subr.mxu0 0.0
        %556 = vmatpush1.msra.mxu0 0.0
        %557 = vmatprep.subr.mxu0 0.0
        %558 = vmatpush1.msra.mxu0 0.0
        %559 = vmatprep.subr.mxu0 0.0
        %560 = vmatpush1.msra.mxu0 0.0
        %561 = vmatprep.subr.mxu0 0.0
        %562 = vmatpush1.msra.mxu0 0.0
        %563 = vmatprep.subr.mxu0 0.0
        %564 = vmatpush1.msra.mxu0 0.0
        %565 = vmatprep.subr.mxu0 0.0
        %566 = vmatpush1.msra.mxu0 0.0
        %567 = vmatprep.subr.mxu0 0.0
        %568 = vmatpush1.msra.mxu0 0.0
        %569 = vmatprep.subr.mxu0 0.0
        %570 = vmatpush1.msra.mxu0 0.0
        %571 = vmatprep.subr.mxu0 0.0
        %572 = vmatpush1.msra.mxu0 0.0
        %573 = vmatprep.subr.mxu0 0.0
        %574 = vmatpush1.msra.mxu0 0.0
        %575 = vmatprep.subr.mxu0 0.0
        %576 = vmatpush1.msra.mxu0 0.0
        %577 = vmatprep.subr.mxu0 0.0
        %578 = vmatpush1.msra.mxu0 0.0
        %579 = vmatprep.subr.mxu0 0.0
        %580 = vmatpush1.msra.mxu0 0.0
        %581 = vmatprep.subr.mxu0 0.0
        %582 = vmatpush1.msra.mxu0 0.0
        %583 = vmatprep.subr.mxu0 0.0
        %584 = vmatpush1.msra.mxu0 0.0
        %585 = vmatprep.subr.mxu0 0.0
        %586 = vmatpush1.msra.mxu0 0.0
        %587 = vmatprep.subr.mxu0 0.0
        %588 = vmatpush1.msra.mxu0 0.0
        %589 = vmatprep.subr.mxu0 0.0
        %590 = vmatpush1.msra.mxu0 0.0
        %591 = vmatprep.subr.mxu0 0.0
        %592 = vmatpush1.msra.mxu0 0.0
        %593 = vmatprep.subr.mxu0 0.0
        %594 = vmatpush1.msra.mxu0 0.0
        %595 = vmatprep.subr.mxu0 0.0
        %596 = vmatpush1.msra.mxu0 0.0
        %597 = vmatprep.subr.mxu0 0.0
        %598 = vmatpush1.msra.mxu0 0.0
        %599 = vmatprep.subr.mxu0 0.0
        %600 = vmatpush1.msra.mxu0 0.0
        %601 = vmatprep.subr.mxu0 0.0
        %602 = vmatpush1.msra.mxu0 0.0
        %603 = vmatprep.mubr.f32.mxu0 0.0
        %604 = vmatmul.mubr.f32.gmra.mrb[0].mxu0 %v537
        %v605 = vpop.f32.mrb[0].mxu0
        %v606 = vadd.f32 0.0, %v605
        %v607 = vpop.f32.mrb[0].mxu0
        %608 = vdwg.mxu0
        %v609 = vld [vmem:[#allocation11] sm:$0xff]
        %v610 = vld [vmem:[#allocation11 + $0x8] sm:$0xff]
        %v611 = vld [vmem:[#allocation11 + $0x10] sm:$0xff]
        %v612 = vld [vmem:[#allocation11 + $0x18] sm:$0xff]
        %v614 = vsel %vm457, %v452, 0
        %616 = vmatprep.subr.mxu0 0.0
        %617 = vmatpush1.msra.mxu0 %v609
        %618 = vmatprep.subr.mxu0 0.0
        %619 = vmatpush1.msra.mxu0 %v610
        %620 = vmatprep.subr.mxu0 0.0
        %621 = vmatpush1.msra.mxu0 %v611
        %622 = vmatprep.subr.mxu0 0.0
        %623 = vmatpush1.msra.mxu0 %v612
        %624 = vmatprep.subr.mxu0 0.0
        %625 = vmatpush1.msra.mxu0 0.0
        %626 = vmatprep.subr.mxu0 0.0
        %627 = vmatpush1.msra.mxu0 0.0
        %628 = vmatprep.subr.mxu0 0.0
        %629 = vmatpush1.msra.mxu0 0.0
        %630 = vmatprep.subr.mxu0 0.0
        %631 = vmatpush1.msra.mxu0 0.0
        %632 = vmatprep.subr.mxu0 0.0
        %633 = vmatpush1.msra.mxu0 0.0
        %634 = vmatprep.subr.mxu0 0.0
        %635 = vmatpush1.msra.mxu0 0.0
        %636 = vmatprep.subr.mxu0 0.0
        %637 = vmatpush1.msra.mxu0 0.0
        %638 = vmatprep.subr.mxu0 0.0
        %639 = vmatpush1.msra.mxu0 0.0
        %640 = vmatprep.subr.mxu0 0.0
        %641 = vmatpush1.msra.mxu0 0.0
        %642 = vmatprep.subr.mxu0 0.0
        %643 = vmatpush1.msra.mxu0 0.0
        %644 = vmatprep.subr.mxu0 0.0
        %645 = vmatpush1.msra.mxu0 0.0
        %646 = vmatprep.subr.mxu0 0.0
        %647 = vmatpush1.msra.mxu0 0.0
        %648 = vmatprep.subr.mxu0 0.0
        %649 = vmatpush1.msra.mxu0 0.0
        %650 = vmatprep.subr.mxu0 0.0
        %651 = vmatpush1.msra.mxu0 0.0
        %652 = vmatprep.subr.mxu0 0.0
        %653 = vmatpush1.msra.mxu0 0.0
        %654 = vmatprep.subr.mxu0 0.0
        %655 = vmatpush1.msra.mxu0 0.0
        %656 = vmatprep.subr.mxu0 0.0
        %657 = vmatpush1.msra.mxu0 0.0
        %658 = vmatprep.subr.mxu0 0.0
        %659 = vmatpush1.msra.mxu0 0.0
        %660 = vmatprep.subr.mxu0 0.0
        %661 = vmatpush1.msra.mxu0 0.0
        %662 = vmatprep.subr.mxu0 0.0
        %663 = vmatpush1.msra.mxu0 0.0
        %664 = vmatprep.subr.mxu0 0.0
        %665 = vmatpush1.msra.mxu0 0.0
        %666 = vmatprep.subr.mxu0 0.0
        %667 = vmatpush1.msra.mxu0 0.0
        %668 = vmatprep.subr.mxu0 0.0
        %669 = vmatpush1.msra.mxu0 0.0
        %670 = vmatprep.subr.mxu0 0.0
        %671 = vmatpush1.msra.mxu0 0.0
        %672 = vmatprep.subr.mxu0 0.0
        %673 = vmatpush1.msra.mxu0 0.0
        %674 = vmatprep.subr.mxu0 0.0
        %675 = vmatpush1.msra.mxu0 0.0
        %676 = vmatprep.subr.mxu0 0.0
        %677 = vmatpush1.msra.mxu0 0.0
        %678 = vmatprep.subr.mxu0 0.0
        %679 = vmatpush1.msra.mxu0 0.0
        %680 = vmatprep.mubr.f32.mxu0 0.0
        %681 = vmatmul.mubr.f32.gmra.mrb[0].mxu0 %v614
        %v682 = vpop.f32.mrb[0].mxu0
        %v683 = vadd.f32 0.0, %v682
        %v684 = vpop.f32.mrb[0].mxu0
        %685 = vdwg.mxu0
        %687 = vrot.lane.b32.xlu0 %v531, 112
        %v688 = vpop.permute.xlu0 %687
        %690 = vrot.lane.b32.xlu0 %v531, 96
        %v691 = vpop.permute.xlu0 %690
        %693 = vrot.lane.b32.xlu0 %v531, 80
        %v694 = vpop.permute.xlu0 %693
        %v696 = vcombine.low %v531, %v691
        %v697 = vcombine.high %v531, %v691
        %v699 = vunpack.c.l.s4 1983009808
        %v700 = vunpack.c.0.s8 %v699
        %v701 = vlaneseq
        %v702 = vshrl.u32 %v701, 7
        %v703 = vsub.s32 %v700, %v702
        %v704 = vrot.slane %v696, %v703
        %v706 = vunpack.c.l.s4 1983009808
        %v707 = vunpack.c.0.s8 %v706
        %v708 = vlaneseq
        %v709 = vshrl.u32 %v708, 7
        %v710 = vsub.s32 %v707, %v709
        %v711 = vrot.slane %v697, %v710
        %v712 = vcombine.low %v688, %v694
        %v713 = vcombine.high %v688, %v694
        %v715 = vunpack.c.l.s4 1983009808
        %v716 = vunpack.c.0.s8 %v715
        %v717 = vlaneseq
        %v718 = vshrl.u32 %v717, 7
        %v719 = vsub.s32 %v716, %v718
        %v720 = vrot.slane %v712, %v719
        %v722 = vunpack.c.l.s4 1983009808
        %v723 = vunpack.c.0.s8 %v722
        %v724 = vlaneseq
        %v725 = vshrl.u32 %v724, 7
        %v726 = vsub.s32 %v723, %v725
        %v727 = vrot.slane %v713, %v726
        %v728 = vcombine.low %v704, %v720
        %v729 = vcombine.high %v704, %v720
        %v731 = vunpack.c.l.s4 1934713408
        %v732 = vunpack.c.0.s8 %v731
        %v733 = vlaneseq
        %v734 = vshrl.u32 %v733, 7
        %v735 = vsub.s32 %v732, %v734
        %v736 = vrot.slane %v728, %v735
        %v738 = vunpack.c.l.s4 1934713408
        %v739 = vunpack.c.0.s8 %v738
        %v740 = vlaneseq
        %v741 = vshrl.u32 %v740, 7
        %v742 = vsub.s32 %v739, %v741
        %v743 = vrot.slane %v729, %v742
        %v744 = vcombine.low %v711, %v727
        %v745 = vcombine.high %v711, %v727
        %v747 = vunpack.c.l.s4 1934713408
        %v748 = vunpack.c.0.s8 %v747
        %v749 = vlaneseq
        %v750 = vshrl.u32 %v749, 7
        %v751 = vsub.s32 %v748, %v750
        %v752 = vrot.slane %v744, %v751
        %v754 = vunpack.c.l.s4 1934713408
        %v755 = vunpack.c.0.s8 %v754
        %v756 = vlaneseq
        %v757 = vshrl.u32 %v756, 7
        %v758 = vsub.s32 %v755, %v757
        %v759 = vrot.slane %v745, %v758
        %v760 = vcombine.high %v736, 0.0
        %v761 = vcombine.high %v743, 0.0
        %v762 = vcombine.high %v752, 0.0
        %v763 = vcombine.high %v759, 0.0
        %v764 = vcombine.low %v736, %v743
        %v766 = vunpack.c.l.s4 1983009808
        %v767 = vunpack.c.0.s8 %v766
        %v768 = vlaneseq
        %v769 = vshrl.u32 %v768, 7
        %v770 = vsub.s32 %v767, %v769
        %v771 = vrot.slane %v764, %v770
        %v772 = vcombine.low %v760, %v761
        %v774 = vunpack.c.l.s4 1983009808
        %v775 = vunpack.c.0.s8 %v774
        %v776 = vlaneseq
        %v777 = vshrl.u32 %v776, 7
        %v778 = vsub.s32 %v775, %v777
        %v779 = vrot.slane %v772, %v778
        %v780 = vcombine.low %v752, %v759
        %v782 = vunpack.c.l.s4 1983009808
        %v783 = vunpack.c.0.s8 %v782
        %v784 = vlaneseq
        %v785 = vshrl.u32 %v784, 7
        %v786 = vsub.s32 %v783, %v785
        %v787 = vrot.slane %v780, %v786
        %v788 = vcombine.low %v762, %v763
        %v790 = vunpack.c.l.s4 1983009808
        %v791 = vunpack.c.0.s8 %v790
        %v792 = vlaneseq
        %v793 = vshrl.u32 %v792, 7
        %v794 = vsub.s32 %v791, %v793
        %v795 = vrot.slane %v788, %v794
        %v796 = vcombine.low %v771, %v779
        %v797 = vcombine.high %v771, %v779
        %v799 = vunpack.c.l.s4 1934713408
        %v800 = vunpack.c.0.s8 %v799
        %v801 = vlaneseq
        %v802 = vshrl.u32 %v801, 7
        %v803 = vsub.s32 %v800, %v802
        %v804 = vrot.slane %v796, %v803
        %v806 = vunpack.c.l.s4 1934713408
        %v807 = vunpack.c.0.s8 %v806
        %v808 = vlaneseq
        %v809 = vshrl.u32 %v808, 7
        %v810 = vsub.s32 %v807, %v809
        %v811 = vrot.slane %v797, %v810
        %v812 = vcombine.low %v787, %v795
        %v813 = vcombine.high %v787, %v795
        %v815 = vunpack.c.l.s4 1934713408
        %v816 = vunpack.c.0.s8 %v815
        %v817 = vlaneseq
        %v818 = vshrl.u32 %v817, 7
        %v819 = vsub.s32 %v816, %v818
        %v820 = vrot.slane %v812, %v819
        %v822 = vunpack.c.l.s4 1934713408
        %v823 = vunpack.c.0.s8 %v822
        %v824 = vlaneseq
        %v825 = vshrl.u32 %v824, 7
        %v826 = vsub.s32 %v823, %v825
        %v827 = vrot.slane %v813, %v826
        %v828 = vcombine.low %v804, %v820
        %v829 = vcombine.high %v804, %v820
        %v830 = vcombine.low %v811, %v827
        %v831 = vcombine.high %v811, %v827
        %833 = vrot.lane.b32.xlu0 %v606, 112
        %v834 = vpop.permute.xlu0 %833
        %836 = vrot.lane.b32.xlu0 %v606, 96
        %v837 = vpop.permute.xlu0 %836
        %839 = vrot.lane.b32.xlu0 %v606, 80
        %v840 = vpop.permute.xlu0 %839
        %v842 = vcombine.low %v606, %v837
        %v843 = vcombine.high %v606, %v837
        %v845 = vunpack.c.l.s4 1983009808
        %v846 = vunpack.c.0.s8 %v845
        %v847 = vlaneseq
        %v848 = vshrl.u32 %v847, 7
        %v849 = vsub.s32 %v846, %v848
        %v850 = vrot.slane %v842, %v849
        %v852 = vunpack.c.l.s4 1983009808
        %v853 = vunpack.c.0.s8 %v852
        %v854 = vlaneseq
        %v855 = vshrl.u32 %v854, 7
        %v856 = vsub.s32 %v853, %v855
        %v857 = vrot.slane %v843, %v856
        %v858 = vcombine.low %v834, %v840
        %v859 = vcombine.high %v834, %v840
        %v861 = vunpack.c.l.s4 1983009808
        %v862 = vunpack.c.0.s8 %v861
        %v863 = vlaneseq
        %v864 = vshrl.u32 %v863, 7
        %v865 = vsub.s32 %v862, %v864
        %v866 = vrot.slane %v858, %v865
        %v868 = vunpack.c.l.s4 1983009808
        %v869 = vunpack.c.0.s8 %v868
        %v870 = vlaneseq
        %v871 = vshrl.u32 %v870, 7
        %v872 = vsub.s32 %v869, %v871
        %v873 = vrot.slane %v859, %v872
        %v874 = vcombine.low %v850, %v866
        %v875 = vcombine.high %v850, %v866
        %v877 = vunpack.c.l.s4 1934713408
        %v878 = vunpack.c.0.s8 %v877
        %v879 = vlaneseq
        %v880 = vshrl.u32 %v879, 7
        %v881 = vsub.s32 %v878, %v880
        %v882 = vrot.slane %v874, %v881
        %v884 = vunpack.c.l.s4 1934713408
        %v885 = vunpack.c.0.s8 %v884
        %v886 = vlaneseq
        %v887 = vshrl.u32 %v886, 7
        %v888 = vsub.s32 %v885, %v887
        %v889 = vrot.slane %v875, %v888
        %v890 = vcombine.low %v857, %v873
        %v891 = vcombine.high %v857, %v873
        %v893 = vunpack.c.l.s4 1934713408
        %v894 = vunpack.c.0.s8 %v893
        %v895 = vlaneseq
        %v896 = vshrl.u32 %v895, 7
        %v897 = vsub.s32 %v894, %v896
        %v898 = vrot.slane %v890, %v897
        %v900 = vunpack.c.l.s4 1934713408
        %v901 = vunpack.c.0.s8 %v900
        %v902 = vlaneseq
        %v903 = vshrl.u32 %v902, 7
        %v904 = vsub.s32 %v901, %v903
        %v905 = vrot.slane %v891, %v904
        %v906 = vcombine.high %v882, 0.0
        %v907 = vcombine.high %v889, 0.0
        %v908 = vcombine.high %v898, 0.0
        %v909 = vcombine.high %v905, 0.0
        %v910 = vcombine.low %v882, %v889
        %v912 = vunpack.c.l.s4 1983009808
        %v913 = vunpack.c.0.s8 %v912
        %v914 = vlaneseq
        %v915 = vshrl.u32 %v914, 7
        %v916 = vsub.s32 %v913, %v915
        %v917 = vrot.slane %v910, %v916
        %v918 = vcombine.low %v906, %v907
        %v920 = vunpack.c.l.s4 1983009808
        %v921 = vunpack.c.0.s8 %v920
        %v922 = vlaneseq
        %v923 = vshrl.u32 %v922, 7
        %v924 = vsub.s32 %v921, %v923
        %v925 = vrot.slane %v918, %v924
        %v926 = vcombine.low %v898, %v905
        %v928 = vunpack.c.l.s4 1983009808
        %v929 = vunpack.c.0.s8 %v928
        %v930 = vlaneseq
        %v931 = vshrl.u32 %v930, 7
        %v932 = vsub.s32 %v929, %v931
        %v933 = vrot.slane %v926, %v932
        %v934 = vcombine.low %v908, %v909
        %v936 = vunpack.c.l.s4 1983009808
        %v937 = vunpack.c.0.s8 %v936
        %v938 = vlaneseq
        %v939 = vshrl.u32 %v938, 7
        %v940 = vsub.s32 %v937, %v939
        %v941 = vrot.slane %v934, %v940
        %v942 = vcombine.low %v917, %v925
        %v943 = vcombine.high %v917, %v925
        %v945 = vunpack.c.l.s4 1934713408
        %v946 = vunpack.c.0.s8 %v945
        %v947 = vlaneseq
        %v948 = vshrl.u32 %v947, 7
        %v949 = vsub.s32 %v946, %v948
        %v950 = vrot.slane %v942, %v949
        %v952 = vunpack.c.l.s4 1934713408
        %v953 = vunpack.c.0.s8 %v952
        %v954 = vlaneseq
        %v955 = vshrl.u32 %v954, 7
        %v956 = vsub.s32 %v953, %v955
        %v957 = vrot.slane %v943, %v956
        %v958 = vcombine.low %v933, %v941
        %v959 = vcombine.high %v933, %v941
        %v961 = vunpack.c.l.s4 1934713408
        %v962 = vunpack.c.0.s8 %v961
        %v963 = vlaneseq
        %v964 = vshrl.u32 %v963, 7
        %v965 = vsub.s32 %v962, %v964
        %v966 = vrot.slane %v958, %v965
        %v968 = vunpack.c.l.s4 1934713408
        %v969 = vunpack.c.0.s8 %v968
        %v970 = vlaneseq
        %v971 = vshrl.u32 %v970, 7
        %v972 = vsub.s32 %v969, %v971
        %v973 = vrot.slane %v959, %v972
        %v974 = vcombine.low %v950, %v966
        %v975 = vcombine.high %v950, %v966
        %v976 = vcombine.low %v957, %v973
        %v977 = vcombine.high %v957, %v973
        %979 = vrot.lane.b32.xlu0 %v683, 112
        %v980 = vpop.permute.xlu0 %979
        %982 = vrot.lane.b32.xlu0 %v683, 96
        %v983 = vpop.permute.xlu0 %982
        %985 = vrot.lane.b32.xlu0 %v683, 80
        %v986 = vpop.permute.xlu0 %985
        %v988 = vcombine.low %v683, %v983
        %v989 = vcombine.high %v683, %v983
        %v991 = vunpack.c.l.s4 1983009808
        %v992 = vunpack.c.0.s8 %v991
        %v993 = vlaneseq
        %v994 = vshrl.u32 %v993, 7
        %v995 = vsub.s32 %v992, %v994
        %v996 = vrot.slane %v988, %v995
        %v998 = vunpack.c.l.s4 1983009808
        %v999 = vunpack.c.0.s8 %v998
        %v1000 = vlaneseq
        %v1001 = vshrl.u32 %v1000, 7
        %v1002 = vsub.s32 %v999, %v1001
        %v1003 = vrot.slane %v989, %v1002
        %v1004 = vcombine.low %v980, %v986
        %v1005 = vcombine.high %v980, %v986
        %v1007 = vunpack.c.l.s4 1983009808
        %v1008 = vunpack.c.0.s8 %v1007
        %v1009 = vlaneseq
        %v1010 = vshrl.u32 %v1009, 7
        %v1011 = vsub.s32 %v1008, %v1010
        %v1012 = vrot.slane %v1004, %v1011
        %v1014 = vunpack.c.l.s4 1983009808
        %v1015 = vunpack.c.0.s8 %v1014
        %v1016 = vlaneseq
        %v1017 = vshrl.u32 %v1016, 7
        %v1018 = vsub.s32 %v1015, %v1017
        %v1019 = vrot.slane %v1005, %v1018
        %v1020 = vcombine.low %v996, %v1012
        %v1021 = vcombine.high %v996, %v1012
        %v1023 = vunpack.c.l.s4 1934713408
        %v1024 = vunpack.c.0.s8 %v1023
        %v1025 = vlaneseq
        %v1026 = vshrl.u32 %v1025, 7
        %v1027 = vsub.s32 %v1024, %v1026
        %v1028 = vrot.slane %v1020, %v1027
        %v1030 = vunpack.c.l.s4 1934713408
        %v1031 = vunpack.c.0.s8 %v1030
        %v1032 = vlaneseq
        %v1033 = vshrl.u32 %v1032, 7
        %v1034 = vsub.s32 %v1031, %v1033
        %v1035 = vrot.slane %v1021, %v1034
        %v1036 = vcombine.low %v1003, %v1019
        %v1037 = vcombine.high %v1003, %v1019
        %v1039 = vunpack.c.l.s4 1934713408
        %v1040 = vunpack.c.0.s8 %v1039
        %v1041 = vlaneseq
        %v1042 = vshrl.u32 %v1041, 7
        %v1043 = vsub.s32 %v1040, %v1042
        %v1044 = vrot.slane %v1036, %v1043
        %v1046 = vunpack.c.l.s4 1934713408
        %v1047 = vunpack.c.0.s8 %v1046
        %v1048 = vlaneseq
        %v1049 = vshrl.u32 %v1048, 7
        %v1050 = vsub.s32 %v1047, %v1049
        %v1051 = vrot.slane %v1037, %v1050
        %v1052 = vcombine.high %v1028, 0.0
        %v1053 = vcombine.high %v1035, 0.0
        %v1054 = vcombine.high %v1044, 0.0
        %v1055 = vcombine.high %v1051, 0.0
        %v1056 = vcombine.low %v1028, %v1035
        %v1058 = vunpack.c.l.s4 1983009808
        %v1059 = vunpack.c.0.s8 %v1058
        %v1060 = vlaneseq
        %v1061 = vshrl.u32 %v1060, 7
        %v1062 = vsub.s32 %v1059, %v1061
        %v1063 = vrot.slane %v1056, %v1062
        %v1064 = vcombine.low %v1052, %v1053
        %v1066 = vunpack.c.l.s4 1983009808
        %v1067 = vunpack.c.0.s8 %v1066
        %v1068 = vlaneseq
        %v1069 = vshrl.u32 %v1068, 7
        %v1070 = vsub.s32 %v1067, %v1069
        %v1071 = vrot.slane %v1064, %v1070
        %v1072 = vcombine.low %v1044, %v1051
        %v1074 = vunpack.c.l.s4 1983009808
        %v1075 = vunpack.c.0.s8 %v1074
        %v1076 = vlaneseq
        %v1077 = vshrl.u32 %v1076, 7
        %v1078 = vsub.s32 %v1075, %v1077
        %v1079 = vrot.slane %v1072, %v1078
        %v1080 = vcombine.low %v1054, %v1055
        %v1082 = vunpack.c.l.s4 1983009808
        %v1083 = vunpack.c.0.s8 %v1082
        %v1084 = vlaneseq
        %v1085 = vshrl.u32 %v1084, 7
        %v1086 = vsub.s32 %v1083, %v1085
        %v1087 = vrot.slane %v1080, %v1086
        %v1088 = vcombine.low %v1063, %v1071
        %v1089 = vcombine.high %v1063, %v1071
        %v1091 = vunpack.c.l.s4 1934713408
        %v1092 = vunpack.c.0.s8 %v1091
        %v1093 = vlaneseq
        %v1094 = vshrl.u32 %v1093, 7
        %v1095 = vsub.s32 %v1092, %v1094
        %v1096 = vrot.slane %v1088, %v1095
        %v1098 = vunpack.c.l.s4 1934713408
        %v1099 = vunpack.c.0.s8 %v1098
        %v1100 = vlaneseq
        %v1101 = vshrl.u32 %v1100, 7
        %v1102 = vsub.s32 %v1099, %v1101
        %v1103 = vrot.slane %v1089, %v1102
        %v1104 = vcombine.low %v1079, %v1087
        %v1105 = vcombine.high %v1079, %v1087
        %v1107 = vunpack.c.l.s4 1934713408
        %v1108 = vunpack.c.0.s8 %v1107
        %v1109 = vlaneseq
        %v1110 = vshrl.u32 %v1109, 7
        %v1111 = vsub.s32 %v1108, %v1110
        %v1112 = vrot.slane %v1104, %v1111
        %v1114 = vunpack.c.l.s4 1934713408
        %v1115 = vunpack.c.0.s8 %v1114
        %v1116 = vlaneseq
        %v1117 = vshrl.u32 %v1116, 7
        %v1118 = vsub.s32 %v1115, %v1117
        %v1119 = vrot.slane %v1105, %v1118
        %v1120 = vcombine.low %v1096, %v1112
        %v1121 = vcombine.high %v1096, %v1112
        %v1122 = vcombine.low %v1103, %v1119
        %v1123 = vcombine.high %v1103, %v1119
        %vm1124 = vcmask 130048
        %v1126 = vsel %vm1124, %v828, 0
        %v1129 = vsel %vm1124, %v974, 0
        %1131 = vmatprep.subr.mxu0 0.0
        %1132 = vmatpush1.xpose.msra.mxu0 %v1129
        %1133 = vmatprep.subr.mxu0 0.0
        %1134 = vmatpush1.xpose.msra.mxu0 0.0
        %1135 = vmatprep.subr.mxu0 0.0
        %1136 = vmatpush1.xpose.msra.mxu0 0.0
        %1137 = vmatprep.subr.mxu0 0.0
        %1138 = vmatpush1.xpose.msra.mxu0 0.0
        %1139 = vmatprep.subr.mxu0 0.0
        %1140 = vmatpush1.xpose.msra.mxu0 0.0
        %1141 = vmatprep.subr.mxu0 0.0
        %1142 = vmatpush1.xpose.msra.mxu0 0.0
        %1143 = vmatprep.subr.mxu0 0.0
        %1144 = vmatpush1.xpose.msra.mxu0 0.0
        %1145 = vmatprep.subr.mxu0 0.0
        %1146 = vmatpush1.xpose.msra.mxu0 0.0
        %1147 = vmatprep.subr.mxu0 0.0
        %1148 = vmatpush1.xpose.msra.mxu0 0.0
        %1149 = vmatprep.subr.mxu0 0.0
        %1150 = vmatpush1.xpose.msra.mxu0 0.0
        %1151 = vmatprep.subr.mxu0 0.0
        %1152 = vmatpush1.xpose.msra.mxu0 0.0
        %1153 = vmatprep.subr.mxu0 0.0
        %1154 = vmatpush1.xpose.msra.mxu0 0.0
        %1155 = vmatprep.subr.mxu0 0.0
        %1156 = vmatpush1.xpose.msra.mxu0 0.0
        %1157 = vmatprep.subr.mxu0 0.0
        %1158 = vmatpush1.xpose.msra.mxu0 0.0
        %1159 = vmatprep.subr.mxu0 0.0
        %1160 = vmatpush1.xpose.msra.mxu0 0.0
        %1161 = vmatprep.subr.mxu0 0.0
        %1162 = vmatpush1.xpose.msra.mxu0 0.0
        %1163 = vmatprep.subr.mxu0 0.0
        %1164 = vmatpush1.xpose.msra.mxu0 0.0
        %1165 = vmatprep.subr.mxu0 0.0
        %1166 = vmatpush1.xpose.msra.mxu0 0.0
        %1167 = vmatprep.subr.mxu0 0.0
        %1168 = vmatpush1.xpose.msra.mxu0 0.0
        %1169 = vmatprep.subr.mxu0 0.0
        %1170 = vmatpush1.xpose.msra.mxu0 0.0
        %1171 = vmatprep.subr.mxu0 0.0
        %1172 = vmatpush1.xpose.msra.mxu0 0.0
        %1173 = vmatprep.subr.mxu0 0.0
        %1174 = vmatpush1.xpose.msra.mxu0 0.0
        %1175 = vmatprep.subr.mxu0 0.0
        %1176 = vmatpush1.xpose.msra.mxu0 0.0
        %1177 = vmatprep.subr.mxu0 0.0
        %1178 = vmatpush1.xpose.msra.mxu0 0.0
        %1179 = vmatprep.subr.mxu0 0.0
        %1180 = vmatpush1.xpose.msra.mxu0 0.0
        %1181 = vmatprep.subr.mxu0 0.0
        %1182 = vmatpush1.xpose.msra.mxu0 0.0
        %1183 = vmatprep.subr.mxu0 0.0
        %1184 = vmatpush1.xpose.msra.mxu0 0.0
        %1185 = vmatprep.subr.mxu0 0.0
        %1186 = vmatpush1.xpose.msra.mxu0 0.0
        %1187 = vmatprep.subr.mxu0 0.0
        %1188 = vmatpush1.xpose.msra.mxu0 0.0
        %1189 = vmatprep.subr.mxu0 0.0
        %1190 = vmatpush1.xpose.msra.mxu0 0.0
        %1191 = vmatprep.subr.mxu0 0.0
        %1192 = vmatpush1.xpose.msra.mxu0 0.0
        %1193 = vmatprep.subr.mxu0 0.0
        %1194 = vmatpush1.xpose.msra.mxu0 0.0
        %1195 = vmatprep.mubr.f32.mxu0 0.0
        %1196 = vmatmul.mubr.f32.gmra.mrb[0].mxu0 %v1126
        %v1197 = vpop.f32.mrb[0].mxu0
        %v1198 = vadd.f32 0.0, %v1197
        %v1199 = vpop.f32.mrb[0].mxu0
        %1200 = vdwg.mxu0
        %v1202 = vsel %vm1124, %v829, 0
        %v1205 = vsel %vm1124, %v975, 0
        %1207 = vmatprep.subr.mxu0 0.0
        %1208 = vmatpush1.xpose.msra.mxu0 %v1205
        %1209 = vmatprep.subr.mxu0 0.0
        %1210 = vmatpush1.xpose.msra.mxu0 0.0
        %1211 = vmatprep.subr.mxu0 0.0
        %1212 = vmatpush1.xpose.msra.mxu0 0.0
        %1213 = vmatprep.subr.mxu0 0.0
        %1214 = vmatpush1.xpose.msra.mxu0 0.0
        %1215 = vmatprep.subr.mxu0 0.0
        %1216 = vmatpush1.xpose.msra.mxu0 0.0
        %1217 = vmatprep.subr.mxu0 0.0
        %1218 = vmatpush1.xpose.msra.mxu0 0.0
        %1219 = vmatprep.subr.mxu0 0.0
        %1220 = vmatpush1.xpose.msra.mxu0 0.0
        %1221 = vmatprep.subr.mxu0 0.0
        %1222 = vmatpush1.xpose.msra.mxu0 0.0
        %1223 = vmatprep.subr.mxu0 0.0
        %1224 = vmatpush1.xpose.msra.mxu0 0.0
        %1225 = vmatprep.subr.mxu0 0.0
        %1226 = vmatpush1.xpose.msra.mxu0 0.0
        %1227 = vmatprep.subr.mxu0 0.0
        %1228 = vmatpush1.xpose.msra.mxu0 0.0
        %1229 = vmatprep.subr.mxu0 0.0
        %1230 = vmatpush1.xpose.msra.mxu0 0.0
        %1231 = vmatprep.subr.mxu0 0.0
        %1232 = vmatpush1.xpose.msra.mxu0 0.0
        %1233 = vmatprep.subr.mxu0 0.0
        %1234 = vmatpush1.xpose.msra.mxu0 0.0
        %1235 = vmatprep.subr.mxu0 0.0
        %1236 = vmatpush1.xpose.msra.mxu0 0.0
        %1237 = vmatprep.subr.mxu0 0.0
        %1238 = vmatpush1.xpose.msra.mxu0 0.0
        %1239 = vmatprep.subr.mxu0 0.0
        %1240 = vmatpush1.xpose.msra.mxu0 0.0
        %1241 = vmatprep.subr.mxu0 0.0
        %1242 = vmatpush1.xpose.msra.mxu0 0.0
        %1243 = vmatprep.subr.mxu0 0.0
        %1244 = vmatpush1.xpose.msra.mxu0 0.0
        %1245 = vmatprep.subr.mxu0 0.0
        %1246 = vmatpush1.xpose.msra.mxu0 0.0
        %1247 = vmatprep.subr.mxu0 0.0
        %1248 = vmatpush1.xpose.msra.mxu0 0.0
        %1249 = vmatprep.subr.mxu0 0.0
        %1250 = vmatpush1.xpose.msra.mxu0 0.0
        %1251 = vmatprep.subr.mxu0 0.0
        %1252 = vmatpush1.xpose.msra.mxu0 0.0
        %1253 = vmatprep.subr.mxu0 0.0
        %1254 = vmatpush1.xpose.msra.mxu0 0.0
        %1255 = vmatprep.subr.mxu0 0.0
        %1256 = vmatpush1.xpose.msra.mxu0 0.0
        %1257 = vmatprep.subr.mxu0 0.0
        %1258 = vmatpush1.xpose.msra.mxu0 0.0
        %1259 = vmatprep.subr.mxu0 0.0
        %1260 = vmatpush1.xpose.msra.mxu0 0.0
        %1261 = vmatprep.subr.mxu0 0.0
        %1262 = vmatpush1.xpose.msra.mxu0 0.0
        %1263 = vmatprep.subr.mxu0 0.0
        %1264 = vmatpush1.xpose.msra.mxu0 0.0
        %1265 = vmatprep.subr.mxu0 0.0
        %1266 = vmatpush1.xpose.msra.mxu0 0.0
        %1267 = vmatprep.subr.mxu0 0.0
        %1268 = vmatpush1.xpose.msra.mxu0 0.0
        %1269 = vmatprep.subr.mxu0 0.0
        %1270 = vmatpush1.xpose.msra.mxu0 0.0
        %1271 = vmatprep.mubr.f32.mxu0 0.0
        %1272 = vmatmul.mubr.f32.gmra.mrb[0].mxu0 %v1202
        %v1273 = vpop.f32.mrb[0].mxu0
        %v1274 = vadd.f32 0.0, %v1273
        %v1275 = vpop.f32.mrb[0].mxu0
        %1276 = vdwg.mxu0
        %v1278 = vsel %vm1124, %v830, 0
        %v1281 = vsel %vm1124, %v976, 0
        %1283 = vmatprep.subr.mxu0 0.0
        %1284 = vmatpush1.xpose.msra.mxu0 %v1281
        %1285 = vmatprep.subr.mxu0 0.0
        %1286 = vmatpush1.xpose.msra.mxu0 0.0
        %1287 = vmatprep.subr.mxu0 0.0
        %1288 = vmatpush1.xpose.msra.mxu0 0.0
        %1289 = vmatprep.subr.mxu0 0.0
        %1290 = vmatpush1.xpose.msra.mxu0 0.0
        %1291 = vmatprep.subr.mxu0 0.0
        %1292 = vmatpush1.xpose.msra.mxu0 0.0
        %1293 = vmatprep.subr.mxu0 0.0
        %1294 = vmatpush1.xpose.msra.mxu0 0.0
        %1295 = vmatprep.subr.mxu0 0.0
        %1296 = vmatpush1.xpose.msra.mxu0 0.0
        %1297 = vmatprep.subr.mxu0 0.0
        %1298 = vmatpush1.xpose.msra.mxu0 0.0
        %1299 = vmatprep.subr.mxu0 0.0
        %1300 = vmatpush1.xpose.msra.mxu0 0.0
        %1301 = vmatprep.subr.mxu0 0.0
        %1302 = vmatpush1.xpose.msra.mxu0 0.0
        %1303 = vmatprep.subr.mxu0 0.0
        %1304 = vmatpush1.xpose.msra.mxu0 0.0
        %1305 = vmatprep.subr.mxu0 0.0
        %1306 = vmatpush1.xpose.msra.mxu0 0.0
        %1307 = vmatprep.subr.mxu0 0.0
        %1308 = vmatpush1.xpose.msra.mxu0 0.0
        %1309 = vmatprep.subr.mxu0 0.0
        %1310 = vmatpush1.xpose.msra.mxu0 0.0
        %1311 = vmatprep.subr.mxu0 0.0
        %1312 = vmatpush1.xpose.msra.mxu0 0.0
        %1313 = vmatprep.subr.mxu0 0.0
        %1314 = vmatpush1.xpose.msra.mxu0 0.0
        %1315 = vmatprep.subr.mxu0 0.0
        %1316 = vmatpush1.xpose.msra.mxu0 0.0
        %1317 = vmatprep.subr.mxu0 0.0
        %1318 = vmatpush1.xpose.msra.mxu0 0.0
        %1319 = vmatprep.subr.mxu0 0.0
        %1320 = vmatpush1.xpose.msra.mxu0 0.0
        %1321 = vmatprep.subr.mxu0 0.0
        %1322 = vmatpush1.xpose.msra.mxu0 0.0
        %1323 = vmatprep.subr.mxu0 0.0
        %1324 = vmatpush1.xpose.msra.mxu0 0.0
        %1325 = vmatprep.subr.mxu0 0.0
        %1326 = vmatpush1.xpose.msra.mxu0 0.0
        %1327 = vmatprep.subr.mxu0 0.0
        %1328 = vmatpush1.xpose.msra.mxu0 0.0
        %1329 = vmatprep.subr.mxu0 0.0
        %1330 = vmatpush1.xpose.msra.mxu0 0.0
        %1331 = vmatprep.subr.mxu0 0.0
        %1332 = vmatpush1.xpose.msra.mxu0 0.0
        %1333 = vmatprep.subr.mxu0 0.0
        %1334 = vmatpush1.xpose.msra.mxu0 0.0
        %1335 = vmatprep.subr.mxu0 0.0
        %1336 = vmatpush1.xpose.msra.mxu0 0.0
        %1337 = vmatprep.subr.mxu0 0.0
        %1338 = vmatpush1.xpose.msra.mxu0 0.0
        %1339 = vmatprep.subr.mxu0 0.0
        %1340 = vmatpush1.xpose.msra.mxu0 0.0
        %1341 = vmatprep.subr.mxu0 0.0
        %1342 = vmatpush1.xpose.msra.mxu0 0.0
        %1343 = vmatprep.subr.mxu0 0.0
        %1344 = vmatpush1.xpose.msra.mxu0 0.0
        %1345 = vmatprep.subr.mxu0 0.0
        %1346 = vmatpush1.xpose.msra.mxu0 0.0
        %1347 = vmatprep.mubr.f32.mxu0 0.0
        %1348 = vmatmul.mubr.f32.gmra.mrb[0].mxu0 %v1278
        %v1349 = vpop.f32.mrb[0].mxu0
        %v1350 = vadd.f32 0.0, %v1349
        %v1351 = vpop.f32.mrb[0].mxu0
        %1352 = vdwg.mxu0
        %v1354 = vsel %vm1124, %v831, 0
        %v1357 = vsel %vm1124, %v977, 0
        %1359 = vmatprep.subr.mxu0 0.0
        %1360 = vmatpush1.xpose.msra.mxu0 %v1357
        %1361 = vmatprep.subr.mxu0 0.0
        %1362 = vmatpush1.xpose.msra.mxu0 0.0
        %1363 = vmatprep.subr.mxu0 0.0
        %1364 = vmatpush1.xpose.msra.mxu0 0.0
        %1365 = vmatprep.subr.mxu0 0.0
        %1366 = vmatpush1.xpose.msra.mxu0 0.0
        %1367 = vmatprep.subr.mxu0 0.0
        %1368 = vmatpush1.xpose.msra.mxu0 0.0
        %1369 = vmatprep.subr.mxu0 0.0
        %1370 = vmatpush1.xpose.msra.mxu0 0.0
        %1371 = vmatprep.subr.mxu0 0.0
        %1372 = vmatpush1.xpose.msra.mxu0 0.0
        %1373 = vmatprep.subr.mxu0 0.0
        %1374 = vmatpush1.xpose.msra.mxu0 0.0
        %1375 = vmatprep.subr.mxu0 0.0
        %1376 = vmatpush1.xpose.msra.mxu0 0.0
        %1377 = vmatprep.subr.mxu0 0.0
        %1378 = vmatpush1.xpose.msra.mxu0 0.0
        %1379 = vmatprep.subr.mxu0 0.0
        %1380 = vmatpush1.xpose.msra.mxu0 0.0
        %1381 = vmatprep.subr.mxu0 0.0
        %1382 = vmatpush1.xpose.msra.mxu0 0.0
        %1383 = vmatprep.subr.mxu0 0.0
        %1384 = vmatpush1.xpose.msra.mxu0 0.0
        %1385 = vmatprep.subr.mxu0 0.0
        %1386 = vmatpush1.xpose.msra.mxu0 0.0
        %1387 = vmatprep.subr.mxu0 0.0
        %1388 = vmatpush1.xpose.msra.mxu0 0.0
        %1389 = vmatprep.subr.mxu0 0.0
        %1390 = vmatpush1.xpose.msra.mxu0 0.0
        %1391 = vmatprep.subr.mxu0 0.0
        %1392 = vmatpush1.xpose.msra.mxu0 0.0
        %1393 = vmatprep.subr.mxu0 0.0
        %1394 = vmatpush1.xpose.msra.mxu0 0.0
        %1395 = vmatprep.subr.mxu0 0.0
        %1396 = vmatpush1.xpose.msra.mxu0 0.0
        %1397 = vmatprep.subr.mxu0 0.0
        %1398 = vmatpush1.xpose.msra.mxu0 0.0
        %1399 = vmatprep.subr.mxu0 0.0
        %1400 = vmatpush1.xpose.msra.mxu0 0.0
        %1401 = vmatprep.subr.mxu0 0.0
        %1402 = vmatpush1.xpose.msra.mxu0 0.0
        %1403 = vmatprep.subr.mxu0 0.0
        %1404 = vmatpush1.xpose.msra.mxu0 0.0
        %1405 = vmatprep.subr.mxu0 0.0
        %1406 = vmatpush1.xpose.msra.mxu0 0.0
        %1407 = vmatprep.subr.mxu0 0.0
        %1408 = vmatpush1.xpose.msra.mxu0 0.0
        %1409 = vmatprep.subr.mxu0 0.0
        %1410 = vmatpush1.xpose.msra.mxu0 0.0
        %1411 = vmatprep.subr.mxu0 0.0
        %1412 = vmatpush1.xpose.msra.mxu0 0.0
        %1413 = vmatprep.subr.mxu0 0.0
        %1414 = vmatpush1.xpose.msra.mxu0 0.0
        %1415 = vmatprep.subr.mxu0 0.0
        %1416 = vmatpush1.xpose.msra.mxu0 0.0
        %1417 = vmatprep.subr.mxu0 0.0
        %1418 = vmatpush1.xpose.msra.mxu0 0.0
        %1419 = vmatprep.subr.mxu0 0.0
        %1420 = vmatpush1.xpose.msra.mxu0 0.0
        %1421 = vmatprep.subr.mxu0 0.0
        %1422 = vmatpush1.xpose.msra.mxu0 0.0
        %1423 = vmatprep.mubr.f32.mxu0 0.0
        %1424 = vmatmul.mubr.f32.gmra.mrb[0].mxu0 %v1354
        %v1425 = vpop.f32.mrb[0].mxu0
        %v1426 = vadd.f32 0.0, %v1425
        %v1427 = vpop.f32.mrb[0].mxu0
        %1428 = vdwg.mxu0
        %vm1429 = vcmask 64512
        %v1430 = vsel %vm1429, %v1198, -inf
        %1431 = vmax.xlane.f32.xlu0 %v1430
        %v1432 = vpop.xlane.xlu0 %1431
        %v1433 = vsel %vm1429, %v1274, -inf
        %1434 = vmax.xlane.f32.xlu0 %v1433
        %v1435 = vpop.xlane.xlu0 %1434
        %v1436 = vsel %vm1429, %v1350, -inf
        %1437 = vmax.xlane.f32.xlu0 %v1436
        %v1438 = vpop.xlane.xlu0 %1437
        %v1439 = vsel %vm1429, %v1426, -inf
        %1440 = vmax.xlane.f32.xlu0 %v1439
        %v1441 = vpop.xlane.xlu0 %1440
        %v1442 = vsub.f32 %v1198, %v1432
        %v1443 = vsub.f32 %v1274, %v1435
        %v1444 = vsub.f32 %v1350, %v1438
        %v1445 = vsub.f32 %v1426, %v1441
        %v1446 = vmul.f32 %v1442, 1.442695
        %v1447 = vpow.pop %v1446
        %v1448 = vmul.f32 %v1443, 1.442695
        %v1449 = vpow.pop %v1448
        %v1450 = vmul.f32 %v1444, 1.442695
        %v1451 = vpow.pop %v1450
        %v1452 = vmul.f32 %v1445, 1.442695
        %v1453 = vpow.pop %v1452
        %v1454 = vsel %vm1429, %v1447, 0.0
        %1455 = vadd.xlane.f32.xlu0 %v1454
        %v1456 = vpop.xlane.xlu0 %1455
        %v1457 = vsel %vm1429, %v1449, 0.0
        %1458 = vadd.xlane.f32.xlu0 %v1457
        %v1459 = vpop.xlane.xlu0 %1458
        %v1460 = vsel %vm1429, %v1451, 0.0
        %1461 = vadd.xlane.f32.xlu0 %v1460
        %v1462 = vpop.xlane.xlu0 %1461
        %v1463 = vsel %vm1429, %v1453, 0.0
        %1464 = vadd.xlane.f32.xlu0 %v1463
        %v1465 = vpop.xlane.xlu0 %1464
        %v1466 = vrcp.pop %v1456
        %v1467 = vrcp.pop %v1459
        %v1468 = vrcp.pop %v1462
        %v1469 = vrcp.pop %v1465
        %v1470 = vmul.f32 %v1447, %v1466
        %v1471 = vmul.f32 %v1449, %v1467
        %v1472 = vmul.f32 %v1451, %v1468
        %v1473 = vmul.f32 %v1453, %v1469
        %v1475 = vsel %vm1429, %v1470, 0
        %1477 = vmatprep.subr.mxu0 0.0
        %1478 = vmatpush1.msra.mxu0 %v1120
        %1479 = vmatprep.subr.mxu0 0.0
        %1480 = vmatpush1.msra.mxu0 0.0
        %1481 = vmatprep.subr.mxu0 0.0
        %1482 = vmatpush1.msra.mxu0 0.0
        %1483 = vmatprep.subr.mxu0 0.0
        %1484 = vmatpush1.msra.mxu0 0.0
        %1485 = vmatprep.subr.mxu0 0.0
        %1486 = vmatpush1.msra.mxu0 0.0
        %1487 = vmatprep.subr.mxu0 0.0
        %1488 = vmatpush1.msra.mxu0 0.0
        %1489 = vmatprep.subr.mxu0 0.0
        %1490 = vmatpush1.msra.mxu0 0.0
        %1491 = vmatprep.subr.mxu0 0.0
        %1492 = vmatpush1.msra.mxu0 0.0
        %1493 = vmatprep.subr.mxu0 0.0
        %1494 = vmatpush1.msra.mxu0 0.0
        %1495 = vmatprep.subr.mxu0 0.0
        %1496 = vmatpush1.msra.mxu0 0.0
        %1497 = vmatprep.subr.mxu0 0.0
        %1498 = vmatpush1.msra.mxu0 0.0
        %1499 = vmatprep.subr.mxu0 0.0
        %1500 = vmatpush1.msra.mxu0 0.0
        %1501 = vmatprep.subr.mxu0 0.0
        %1502 = vmatpush1.msra.mxu0 0.0
        %1503 = vmatprep.subr.mxu0 0.0
        %1504 = vmatpush1.msra.mxu0 0.0
        %1505 = vmatprep.subr.mxu0 0.0
        %1506 = vmatpush1.msra.mxu0 0.0
        %1507 = vmatprep.subr.mxu0 0.0
        %1508 = vmatpush1.msra.mxu0 0.0
        %1509 = vmatprep.subr.mxu0 0.0
        %1510 = vmatpush1.msra.mxu0 0.0
        %1511 = vmatprep.subr.mxu0 0.0
        %1512 = vmatpush1.msra.mxu0 0.0
        %1513 = vmatprep.subr.mxu0 0.0
        %1514 = vmatpush1.msra.mxu0 0.0
        %1515 = vmatprep.subr.mxu0 0.0
        %1516 = vmatpush1.msra.mxu0 0.0
        %1517 = vmatprep.subr.mxu0 0.0
        %1518 = vmatpush1.msra.mxu0 0.0
        %1519 = vmatprep.subr.mxu0 0.0
        %1520 = vmatpush1.msra.mxu0 0.0
        %1521 = vmatprep.subr.mxu0 0.0
        %1522 = vmatpush1.msra.mxu0 0.0
        %1523 = vmatprep.subr.mxu0 0.0
        %1524 = vmatpush1.msra.mxu0 0.0
        %1525 = vmatprep.subr.mxu0 0.0
        %1526 = vmatpush1.msra.mxu0 0.0
        %1527 = vmatprep.subr.mxu0 0.0
        %1528 = vmatpush1.msra.mxu0 0.0
        %1529 = vmatprep.subr.mxu0 0.0
        %1530 = vmatpush1.msra.mxu0 0.0
        %1531 = vmatprep.subr.mxu0 0.0
        %1532 = vmatpush1.msra.mxu0 0.0
        %1533 = vmatprep.subr.mxu0 0.0
        %1534 = vmatpush1.msra.mxu0 0.0
        %1535 = vmatprep.subr.mxu0 0.0
        %1536 = vmatpush1.msra.mxu0 0.0
        %1537 = vmatprep.subr.mxu0 0.0
        %1538 = vmatpush1.msra.mxu0 0.0
        %1539 = vmatprep.subr.mxu0 0.0
        %1540 = vmatpush1.msra.mxu0 0.0
        %1541 = vmatprep.mubr.f32.mxu0 0.0
        %1542 = vmatmul.mubr.f32.gmra.mrb[0].mxu0 %v1475
        %v1543 = vpop.f32.mrb[0].mxu0
        %v1544 = vadd.f32 0.0, %v1543
        %v1545 = vpop.f32.mrb[0].mxu0
        %1546 = vdwg.mxu0
        %v1548 = vsel %vm1429, %v1471, 0
        %1550 = vmatprep.subr.mxu0 0.0
        %1551 = vmatpush1.msra.mxu0 %v1121
        %1552 = vmatprep.subr.mxu0 0.0
        %1553 = vmatpush1.msra.mxu0 0.0
        %1554 = vmatprep.subr.mxu0 0.0
        %1555 = vmatpush1.msra.mxu0 0.0
        %1556 = vmatprep.subr.mxu0 0.0
        %1557 = vmatpush1.msra.mxu0 0.0
        %1558 = vmatprep.subr.mxu0 0.0
        %1559 = vmatpush1.msra.mxu0 0.0
        %1560 = vmatprep.subr.mxu0 0.0
        %1561 = vmatpush1.msra.mxu0 0.0
        %1562 = vmatprep.subr.mxu0 0.0
        %1563 = vmatpush1.msra.mxu0 0.0
        %1564 = vmatprep.subr.mxu0 0.0
        %1565 = vmatpush1.msra.mxu0 0.0
        %1566 = vmatprep.subr.mxu0 0.0
        %1567 = vmatpush1.msra.mxu0 0.0
        %1568 = vmatprep.subr.mxu0 0.0
        %1569 = vmatpush1.msra.mxu0 0.0
        %1570 = vmatprep.subr.mxu0 0.0
        %1571 = vmatpush1.msra.mxu0 0.0
        %1572 = vmatprep.subr.mxu0 0.0
        %1573 = vmatpush1.msra.mxu0 0.0
        %1574 = vmatprep.subr.mxu0 0.0
        %1575 = vmatpush1.msra.mxu0 0.0
        %1576 = vmatprep.subr.mxu0 0.0
        %1577 = vmatpush1.msra.mxu0 0.0
        %1578 = vmatprep.subr.mxu0 0.0
        %1579 = vmatpush1.msra.mxu0 0.0
        %1580 = vmatprep.subr.mxu0 0.0
        %1581 = vmatpush1.msra.mxu0 0.0
        %1582 = vmatprep.subr.mxu0 0.0
        %1583 = vmatpush1.msra.mxu0 0.0
        %1584 = vmatprep.subr.mxu0 0.0
        %1585 = vmatpush1.msra.mxu0 0.0
        %1586 = vmatprep.subr.mxu0 0.0
        %1587 = vmatpush1.msra.mxu0 0.0
        %1588 = vmatprep.subr.mxu0 0.0
        %1589 = vmatpush1.msra.mxu0 0.0
        %1590 = vmatprep.subr.mxu0 0.0
        %1591 = vmatpush1.msra.mxu0 0.0
        %1592 = vmatprep.subr.mxu0 0.0
        %1593 = vmatpush1.msra.mxu0 0.0
        %1594 = vmatprep.subr.mxu0 0.0
        %1595 = vmatpush1.msra.mxu0 0.0
        %1596 = vmatprep.subr.mxu0 0.0
        %1597 = vmatpush1.msra.mxu0 0.0
        %1598 = vmatprep.subr.mxu0 0.0
        %1599 = vmatpush1.msra.mxu0 0.0
        %1600 = vmatprep.subr.mxu0 0.0
        %1601 = vmatpush1.msra.mxu0 0.0
        %1602 = vmatprep.subr.mxu0 0.0
        %1603 = vmatpush1.msra.mxu0 0.0
        %1604 = vmatprep.subr.mxu0 0.0
        %1605 = vmatpush1.msra.mxu0 0.0
        %1606 = vmatprep.subr.mxu0 0.0
        %1607 = vmatpush1.msra.mxu0 0.0
        %1608 = vmatprep.subr.mxu0 0.0
        %1609 = vmatpush1.msra.mxu0 0.0
        %1610 = vmatprep.subr.mxu0 0.0
        %1611 = vmatpush1.msra.mxu0 0.0
        %1612 = vmatprep.subr.mxu0 0.0
        %1613 = vmatpush1.msra.mxu0 0.0
        %1614 = vmatprep.mubr.f32.mxu0 0.0
        %1615 = vmatmul.mubr.f32.gmra.mrb[0].mxu0 %v1548
        %v1616 = vpop.f32.mrb[0].mxu0
        %v1617 = vadd.f32 0.0, %v1616
        %v1618 = vpop.f32.mrb[0].mxu0
        %1619 = vdwg.mxu0
        %v1621 = vsel %vm1429, %v1472, 0
        %1623 = vmatprep.subr.mxu0 0.0
        %1624 = vmatpush1.msra.mxu0 %v1122
        %1625 = vmatprep.subr.mxu0 0.0
        %1626 = vmatpush1.msra.mxu0 0.0
        %1627 = vmatprep.subr.mxu0 0.0
        %1628 = vmatpush1.msra.mxu0 0.0
        %1629 = vmatprep.subr.mxu0 0.0
        %1630 = vmatpush1.msra.mxu0 0.0
        %1631 = vmatprep.subr.mxu0 0.0
        %1632 = vmatpush1.msra.mxu0 0.0
        %1633 = vmatprep.subr.mxu0 0.0
        %1634 = vmatpush1.msra.mxu0 0.0
        %1635 = vmatprep.subr.mxu0 0.0
        %1636 = vmatpush1.msra.mxu0 0.0
        %1637 = vmatprep.subr.mxu0 0.0
        %1638 = vmatpush1.msra.mxu0 0.0
        %1639 = vmatprep.subr.mxu0 0.0
        %1640 = vmatpush1.msra.mxu0 0.0
        %1641 = vmatprep.subr.mxu0 0.0
        %1642 = vmatpush1.msra.mxu0 0.0
        %1643 = vmatprep.subr.mxu0 0.0
        %1644 = vmatpush1.msra.mxu0 0.0
        %1645 = vmatprep.subr.mxu0 0.0
        %1646 = vmatpush1.msra.mxu0 0.0
        %1647 = vmatprep.subr.mxu0 0.0
        %1648 = vmatpush1.msra.mxu0 0.0
        %1649 = vmatprep.subr.mxu0 0.0
        %1650 = vmatpush1.msra.mxu0 0.0
        %1651 = vmatprep.subr.mxu0 0.0
        %1652 = vmatpush1.msra.mxu0 0.0
        %1653 = vmatprep.subr.mxu0 0.0
        %1654 = vmatpush1.msra.mxu0 0.0
        %1655 = vmatprep.subr.mxu0 0.0
        %1656 = vmatpush1.msra.mxu0 0.0
        %1657 = vmatprep.subr.mxu0 0.0
        %1658 = vmatpush1.msra.mxu0 0.0
        %1659 = vmatprep.subr.mxu0 0.0
        %1660 = vmatpush1.msra.mxu0 0.0
        %1661 = vmatprep.subr.mxu0 0.0
        %1662 = vmatpush1.msra.mxu0 0.0
        %1663 = vmatprep.subr.mxu0 0.0
        %1664 = vmatpush1.msra.mxu0 0.0
        %1665 = vmatprep.subr.mxu0 0.0
        %1666 = vmatpush1.msra.mxu0 0.0
        %1667 = vmatprep.subr.mxu0 0.0
        %1668 = vmatpush1.msra.mxu0 0.0
        %1669 = vmatprep.subr.mxu0 0.0
        %1670 = vmatpush1.msra.mxu0 0.0
        %1671 = vmatprep.subr.mxu0 0.0
        %1672 = vmatpush1.msra.mxu0 0.0
        %1673 = vmatprep.subr.mxu0 0.0
        %1674 = vmatpush1.msra.mxu0 0.0
        %1675 = vmatprep.subr.mxu0 0.0
        %1676 = vmatpush1.msra.mxu0 0.0
        %1677 = vmatprep.subr.mxu0 0.0
        %1678 = vmatpush1.msra.mxu0 0.0
        %1679 = vmatprep.subr.mxu0 0.0
        %1680 = vmatpush1.msra.mxu0 0.0
        %1681 = vmatprep.subr.mxu0 0.0
        %1682 = vmatpush1.msra.mxu0 0.0
        %1683 = vmatprep.subr.mxu0 0.0
        %1684 = vmatpush1.msra.mxu0 0.0
        %1685 = vmatprep.subr.mxu0 0.0
        %1686 = vmatpush1.msra.mxu0 0.0
        %1687 = vmatprep.mubr.f32.mxu0 0.0
        %1688 = vmatmul.mubr.f32.gmra.mrb[0].mxu0 %v1621
        %v1689 = vpop.f32.mrb[0].mxu0
        %v1690 = vadd.f32 0.0, %v1689
        %v1691 = vpop.f32.mrb[0].mxu0
        %1692 = vdwg.mxu0
        %v1694 = vsel %vm1429, %v1473, 0
        %1696 = vmatprep.subr.mxu0 0.0
        %1697 = vmatpush1.msra.mxu0 %v1123
        %1698 = vmatprep.subr.mxu0 0.0
        %1699 = vmatpush1.msra.mxu0 0.0
        %1700 = vmatprep.subr.mxu0 0.0
        %1701 = vmatpush1.msra.mxu0 0.0
        %1702 = vmatprep.subr.mxu0 0.0
        %1703 = vmatpush1.msra.mxu0 0.0
        %1704 = vmatprep.subr.mxu0 0.0
        %1705 = vmatpush1.msra.mxu0 0.0
        %1706 = vmatprep.subr.mxu0 0.0
        %1707 = vmatpush1.msra.mxu0 0.0
        %1708 = vmatprep.subr.mxu0 0.0
        %1709 = vmatpush1.msra.mxu0 0.0
        %1710 = vmatprep.subr.mxu0 0.0
        %1711 = vmatpush1.msra.mxu0 0.0
        %1712 = vmatprep.subr.mxu0 0.0
        %1713 = vmatpush1.msra.mxu0 0.0
        %1714 = vmatprep.subr.mxu0 0.0
        %1715 = vmatpush1.msra.mxu0 0.0
        %1716 = vmatprep.subr.mxu0 0.0
        %1717 = vmatpush1.msra.mxu0 0.0
        %1718 = vmatprep.subr.mxu0 0.0
        %1719 = vmatpush1.msra.mxu0 0.0
        %1720 = vmatprep.subr.mxu0 0.0
        %1721 = vmatpush1.msra.mxu0 0.0
        %1722 = vmatprep.subr.mxu0 0.0
        %1723 = vmatpush1.msra.mxu0 0.0
        %1724 = vmatprep.subr.mxu0 0.0
        %1725 = vmatpush1.msra.mxu0 0.0
        %1726 = vmatprep.subr.mxu0 0.0
        %1727 = vmatpush1.msra.mxu0 0.0
        %1728 = vmatprep.subr.mxu0 0.0
        %1729 = vmatpush1.msra.mxu0 0.0
        %1730 = vmatprep.subr.mxu0 0.0
        %1731 = vmatpush1.msra.mxu0 0.0
        %1732 = vmatprep.subr.mxu0 0.0
        %1733 = vmatpush1.msra.mxu0 0.0
        %1734 = vmatprep.subr.mxu0 0.0
        %1735 = vmatpush1.msra.mxu0 0.0
        %1736 = vmatprep.subr.mxu0 0.0
        %1737 = vmatpush1.msra.mxu0 0.0
        %1738 = vmatprep.subr.mxu0 0.0
        %1739 = vmatpush1.msra.mxu0 0.0
        %1740 = vmatprep.subr.mxu0 0.0
        %1741 = vmatpush1.msra.mxu0 0.0
        %1742 = vmatprep.subr.mxu0 0.0
        %1743 = vmatpush1.msra.mxu0 0.0
        %1744 = vmatprep.subr.mxu0 0.0
        %1745 = vmatpush1.msra.mxu0 0.0
        %1746 = vmatprep.subr.mxu0 0.0
        %1747 = vmatpush1.msra.mxu0 0.0
        %1748 = vmatprep.subr.mxu0 0.0
        %1749 = vmatpush1.msra.mxu0 0.0
        %1750 = vmatprep.subr.mxu0 0.0
        %1751 = vmatpush1.msra.mxu0 0.0
        %1752 = vmatprep.subr.mxu0 0.0
        %1753 = vmatpush1.msra.mxu0 0.0
        %1754 = vmatprep.subr.mxu0 0.0
        %1755 = vmatpush1.msra.mxu0 0.0
        %1756 = vmatprep.subr.mxu0 0.0
        %1757 = vmatpush1.msra.mxu0 0.0
        %1758 = vmatprep.subr.mxu0 0.0
        %1759 = vmatpush1.msra.mxu0 0.0
        %1760 = vmatprep.mubr.f32.mxu0 0.0
        %1761 = vmatmul.mubr.f32.gmra.mrb[0].mxu0 %v1694
        %v1762 = vpop.f32.mrb[0].mxu0
        %v1763 = vadd.f32 0.0, %v1762
        %v1764 = vpop.f32.mrb[0].mxu0
        %1765 = vdwg.mxu0
        %v1766 = vld [vmem:[#allocation13] sm:$0xff]
        %v1767 = vld [vmem:[#allocation13 + $0x8] sm:$0xff]
        %v1768 = vld [vmem:[#allocation13 + $0x10] sm:$0xff]
        %v1769 = vld [vmem:[#allocation13 + $0x18] sm:$0xff]
        %v1770 = vld [vmem:[#allocation13 + $0x20] sm:$0xff]
        %v1771 = vld [vmem:[#allocation13 + $0x28] sm:$0xff]
        %v1772 = vld [vmem:[#allocation13 + $0x30] sm:$0xff]
        %v1773 = vld [vmem:[#allocation13 + $0x38] sm:$0xff]
        %v1775 = vsel %vm1124, %v1544, 0
        %1777 = vmatprep.subr.mxu0 0.0
        %1778 = vmatpush1.msra.mxu0 %v1766
        %1779 = vmatprep.subr.mxu0 0.0
        %1780 = vmatpush1.msra.mxu0 %v1767
        %1781 = vmatprep.subr.mxu0 0.0
        %1782 = vmatpush1.msra.mxu0 0.0
        %1783 = vmatprep.subr.mxu0 0.0
        %1784 = vmatpush1.msra.mxu0 0.0
        %1785 = vmatprep.subr.mxu0 0.0
        %1786 = vmatpush1.msra.mxu0 0.0
        %1787 = vmatprep.subr.mxu0 0.0
        %1788 = vmatpush1.msra.mxu0 0.0
        %1789 = vmatprep.subr.mxu0 0.0
        %1790 = vmatpush1.msra.mxu0 0.0
        %1791 = vmatprep.subr.mxu0 0.0
        %1792 = vmatpush1.msra.mxu0 0.0
        %1793 = vmatprep.subr.mxu0 0.0
        %1794 = vmatpush1.msra.mxu0 0.0
        %1795 = vmatprep.subr.mxu0 0.0
        %1796 = vmatpush1.msra.mxu0 0.0
        %1797 = vmatprep.subr.mxu0 0.0
        %1798 = vmatpush1.msra.mxu0 0.0
        %1799 = vmatprep.subr.mxu0 0.0
        %1800 = vmatpush1.msra.mxu0 0.0
        %1801 = vmatprep.subr.mxu0 0.0
        %1802 = vmatpush1.msra.mxu0 0.0
        %1803 = vmatprep.subr.mxu0 0.0
        %1804 = vmatpush1.msra.mxu0 0.0
        %1805 = vmatprep.subr.mxu0 0.0
        %1806 = vmatpush1.msra.mxu0 0.0
        %1807 = vmatprep.subr.mxu0 0.0
        %1808 = vmatpush1.msra.mxu0 0.0
        %1809 = vmatprep.subr.mxu0 0.0
        %1810 = vmatpush1.msra.mxu0 0.0
        %1811 = vmatprep.subr.mxu0 0.0
        %1812 = vmatpush1.msra.mxu0 0.0
        %1813 = vmatprep.subr.mxu0 0.0
        %1814 = vmatpush1.msra.mxu0 0.0
        %1815 = vmatprep.subr.mxu0 0.0
        %1816 = vmatpush1.msra.mxu0 0.0
        %1817 = vmatprep.subr.mxu0 0.0
        %1818 = vmatpush1.msra.mxu0 0.0
        %1819 = vmatprep.subr.mxu0 0.0
        %1820 = vmatpush1.msra.mxu0 0.0
        %1821 = vmatprep.subr.mxu0 0.0
        %1822 = vmatpush1.msra.mxu0 0.0
        %1823 = vmatprep.subr.mxu0 0.0
        %1824 = vmatpush1.msra.mxu0 0.0
        %1825 = vmatprep.subr.mxu0 0.0
        %1826 = vmatpush1.msra.mxu0 0.0
        %1827 = vmatprep.subr.mxu0 0.0
        %1828 = vmatpush1.msra.mxu0 0.0
        %1829 = vmatprep.subr.mxu0 0.0
        %1830 = vmatpush1.msra.mxu0 0.0
        %1831 = vmatprep.subr.mxu0 0.0
        %1832 = vmatpush1.msra.mxu0 0.0
        %1833 = vmatprep.subr.mxu0 0.0
        %1834 = vmatpush1.msra.mxu0 0.0
        %1835 = vmatprep.subr.mxu0 0.0
        %1836 = vmatpush1.msra.mxu0 0.0
        %1837 = vmatprep.subr.mxu0 0.0
        %1838 = vmatpush1.msra.mxu0 0.0
        %1839 = vmatprep.subr.mxu0 0.0
        %1840 = vmatpush1.msra.mxu0 0.0
        %1841 = vmatprep.mubr.f32.mxu0 0.0
        %1842 = vmatmul.mubr.f32.gmra.mrb[0].mxu0 %v1775
        %v1843 = vpop.f32.mrb[0].mxu0
        %v1844 = vadd.f32 0.0, %v1843
        %v1845 = vpop.f32.mrb[0].mxu0
        %1846 = vdwg.mxu0
        %v1848 = vsel %vm1124, %v1617, 0
        %1850 = vmatprep.subr.mxu0 0.0
        %1851 = vmatpush1.msra.mxu0 %v1768
        %1852 = vmatprep.subr.mxu0 0.0
        %1853 = vmatpush1.msra.mxu0 %v1769
        %1854 = vmatprep.subr.mxu0 0.0
        %1855 = vmatpush1.msra.mxu0 0.0
        %1856 = vmatprep.subr.mxu0 0.0
        %1857 = vmatpush1.msra.mxu0 0.0
        %1858 = vmatprep.subr.mxu0 0.0
        %1859 = vmatpush1.msra.mxu0 0.0
        %1860 = vmatprep.subr.mxu0 0.0
        %1861 = vmatpush1.msra.mxu0 0.0
        %1862 = vmatprep.subr.mxu0 0.0
        %1863 = vmatpush1.msra.mxu0 0.0
        %1864 = vmatprep.subr.mxu0 0.0
        %1865 = vmatpush1.msra.mxu0 0.0
        %1866 = vmatprep.subr.mxu0 0.0
        %1867 = vmatpush1.msra.mxu0 0.0
        %1868 = vmatprep.subr.mxu0 0.0
        %1869 = vmatpush1.msra.mxu0 0.0
        %1870 = vmatprep.subr.mxu0 0.0
        %1871 = vmatpush1.msra.mxu0 0.0
        %1872 = vmatprep.subr.mxu0 0.0
        %1873 = vmatpush1.msra.mxu0 0.0
        %1874 = vmatprep.subr.mxu0 0.0
        %1875 = vmatpush1.msra.mxu0 0.0
        %1876 = vmatprep.subr.mxu0 0.0
        %1877 = vmatpush1.msra.mxu0 0.0
        %1878 = vmatprep.subr.mxu0 0.0
        %1879 = vmatpush1.msra.mxu0 0.0
        %1880 = vmatprep.subr.mxu0 0.0
        %1881 = vmatpush1.msra.mxu0 0.0
        %1882 = vmatprep.subr.mxu0 0.0
        %1883 = vmatpush1.msra.mxu0 0.0
        %1884 = vmatprep.subr.mxu0 0.0
        %1885 = vmatpush1.msra.mxu0 0.0
        %1886 = vmatprep.subr.mxu0 0.0
        %1887 = vmatpush1.msra.mxu0 0.0
        %1888 = vmatprep.subr.mxu0 0.0
        %1889 = vmatpush1.msra.mxu0 0.0
        %1890 = vmatprep.subr.mxu0 0.0
        %1891 = vmatpush1.msra.mxu0 0.0
        %1892 = vmatprep.subr.mxu0 0.0
        %1893 = vmatpush1.msra.mxu0 0.0
        %1894 = vmatprep.subr.mxu0 0.0
        %1895 = vmatpush1.msra.mxu0 0.0
        %1896 = vmatprep.subr.mxu0 0.0
        %1897 = vmatpush1.msra.mxu0 0.0
        %1898 = vmatprep.subr.mxu0 0.0
        %1899 = vmatpush1.msra.mxu0 0.0
        %1900 = vmatprep.subr.mxu0 0.0
        %1901 = vmatpush1.msra.mxu0 0.0
        %1902 = vmatprep.subr.mxu0 0.0
        %1903 = vmatpush1.msra.mxu0 0.0
        %1904 = vmatprep.subr.mxu0 0.0
        %1905 = vmatpush1.msra.mxu0 0.0
        %1906 = vmatprep.subr.mxu0 0.0
        %1907 = vmatpush1.msra.mxu0 0.0
        %1908 = vmatprep.subr.mxu0 0.0
        %1909 = vmatpush1.msra.mxu0 0.0
        %1910 = vmatprep.subr.mxu0 0.0
        %1911 = vmatpush1.msra.mxu0 0.0
        %1912 = vmatprep.subr.mxu0 0.0
        %1913 = vmatpush1.msra.mxu0 0.0
        %1914 = vmatprep.mubr.f32.mxu0 0.0
        %1915 = vmatmul.mubr.f32.gmra.mrb[0].mxu0 %v1848
        %v1916 = vpop.f32.mrb[0].mxu0
        %v1917 = vadd.f32 0.0, %v1916
        %v1918 = vpop.f32.mrb[0].mxu0
        %1919 = vdwg.mxu0
        %v1921 = vsel %vm1124, %v1690, 0
        %1923 = vmatprep.subr.mxu0 0.0
        %1924 = vmatpush1.msra.mxu0 %v1770
        %1925 = vmatprep.subr.mxu0 0.0
        %1926 = vmatpush1.msra.mxu0 %v1771
        %1927 = vmatprep.subr.mxu0 0.0
        %1928 = vmatpush1.msra.mxu0 0.0
        %1929 = vmatprep.subr.mxu0 0.0
        %1930 = vmatpush1.msra.mxu0 0.0
        %1931 = vmatprep.subr.mxu0 0.0
        %1932 = vmatpush1.msra.mxu0 0.0
        %1933 = vmatprep.subr.mxu0 0.0
        %1934 = vmatpush1.msra.mxu0 0.0
        %1935 = vmatprep.subr.mxu0 0.0
        %1936 = vmatpush1.msra.mxu0 0.0
        %1937 = vmatprep.subr.mxu0 0.0
        %1938 = vmatpush1.msra.mxu0 0.0
        %1939 = vmatprep.subr.mxu0 0.0
        %1940 = vmatpush1.msra.mxu0 0.0
        %1941 = vmatprep.subr.mxu0 0.0
        %1942 = vmatpush1.msra.mxu0 0.0
        %1943 = vmatprep.subr.mxu0 0.0
        %1944 = vmatpush1.msra.mxu0 0.0
        %1945 = vmatprep.subr.mxu0 0.0
        %1946 = vmatpush1.msra.mxu0 0.0
        %1947 = vmatprep.subr.mxu0 0.0
        %1948 = vmatpush1.msra.mxu0 0.0
        %1949 = vmatprep.subr.mxu0 0.0
        %1950 = vmatpush1.msra.mxu0 0.0
        %1951 = vmatprep.subr.mxu0 0.0
        %1952 = vmatpush1.msra.mxu0 0.0
        %1953 = vmatprep.subr.mxu0 0.0
        %1954 = vmatpush1.msra.mxu0 0.0
        %1955 = vmatprep.subr.mxu0 0.0
        %1956 = vmatpush1.msra.mxu0 0.0
        %1957 = vmatprep.subr.mxu0 0.0
        %1958 = vmatpush1.msra.mxu0 0.0
        %1959 = vmatprep.subr.mxu0 0.0
        %1960 = vmatpush1.msra.mxu0 0.0
        %1961 = vmatprep.subr.mxu0 0.0
        %1962 = vmatpush1.msra.mxu0 0.0
        %1963 = vmatprep.subr.mxu0 0.0
        %1964 = vmatpush1.msra.mxu0 0.0
        %1965 = vmatprep.subr.mxu0 0.0
        %1966 = vmatpush1.msra.mxu0 0.0
        %1967 = vmatprep.subr.mxu0 0.0
        %1968 = vmatpush1.msra.mxu0 0.0
        %1969 = vmatprep.subr.mxu0 0.0
        %1970 = vmatpush1.msra.mxu0 0.0
        %1971 = vmatprep.subr.mxu0 0.0
        %1972 = vmatpush1.msra.mxu0 0.0
        %1973 = vmatprep.subr.mxu0 0.0
        %1974 = vmatpush1.msra.mxu0 0.0
        %1975 = vmatprep.subr.mxu0 0.0
        %1976 = vmatpush1.msra.mxu0 0.0
        %1977 = vmatprep.subr.mxu0 0.0
        %1978 = vmatpush1.msra.mxu0 0.0
        %1979 = vmatprep.subr.mxu0 0.0
        %1980 = vmatpush1.msra.mxu0 0.0
        %1981 = vmatprep.subr.mxu0 0.0
        %1982 = vmatpush1.msra.mxu0 0.0
        %1983 = vmatprep.subr.mxu0 0.0
        %1984 = vmatpush1.msra.mxu0 0.0
        %1985 = vmatprep.subr.mxu0 0.0
        %1986 = vmatpush1.msra.mxu0 0.0
        %1987 = vmatprep.mubr.f32.mxu0 0.0
        %1988 = vmatmul.mubr.f32.gmra.mrb[0].mxu0 %v1921
        %v1989 = vpop.f32.mrb[0].mxu0
        %v1990 = vadd.f32 0.0, %v1989
        %v1991 = vpop.f32.mrb[0].mxu0
        %1992 = vdwg.mxu0
        %v1994 = vsel %vm1124, %v1763, 0
        %1996 = vmatprep.subr.mxu0 0.0
        %1997 = vmatpush1.msra.mxu0 %v1772
        %1998 = vmatprep.subr.mxu0 0.0
        %1999 = vmatpush1.msra.mxu0 %v1773
        %2000 = vmatprep.subr.mxu0 0.0
        %2001 = vmatpush1.msra.mxu0 0.0
        %2002 = vmatprep.subr.mxu0 0.0
        %2003 = vmatpush1.msra.mxu0 0.0
        %2004 = vmatprep.subr.mxu0 0.0
        %2005 = vmatpush1.msra.mxu0 0.0
        %2006 = vmatprep.subr.mxu0 0.0
        %2007 = vmatpush1.msra.mxu0 0.0
        %2008 = vmatprep.subr.mxu0 0.0
        %2009 = vmatpush1.msra.mxu0 0.0
        %2010 = vmatprep.subr.mxu0 0.0
        %2011 = vmatpush1.msra.mxu0 0.0
        %2012 = vmatprep.subr.mxu0 0.0
        %2013 = vmatpush1.msra.mxu0 0.0
        %2014 = vmatprep.subr.mxu0 0.0
        %2015 = vmatpush1.msra.mxu0 0.0
        %2016 = vmatprep.subr.mxu0 0.0
        %2017 = vmatpush1.msra.mxu0 0.0
        %2018 = vmatprep.subr.mxu0 0.0
        %2019 = vmatpush1.msra.mxu0 0.0
        %2020 = vmatprep.subr.mxu0 0.0
        %2021 = vmatpush1.msra.mxu0 0.0
        %2022 = vmatprep.subr.mxu0 0.0
        %2023 = vmatpush1.msra.mxu0 0.0
        %2024 = vmatprep.subr.mxu0 0.0
        %2025 = vmatpush1.msra.mxu0 0.0
        %2026 = vmatprep.subr.mxu0 0.0
        %2027 = vmatpush1.msra.mxu0 0.0
        %2028 = vmatprep.subr.mxu0 0.0
        %2029 = vmatpush1.msra.mxu0 0.0
        %2030 = vmatprep.subr.mxu0 0.0
        %2031 = vmatpush1.msra.mxu0 0.0
        %2032 = vmatprep.subr.mxu0 0.0
        %2033 = vmatpush1.msra.mxu0 0.0
        %2034 = vmatprep.subr.mxu0 0.0
        %2035 = vmatpush1.msra.mxu0 0.0
        %2036 = vmatprep.subr.mxu0 0.0
        %2037 = vmatpush1.msra.mxu0 0.0
        %2038 = vmatprep.subr.mxu0 0.0
        %2039 = vmatpush1.msra.mxu0 0.0
        %2040 = vmatprep.subr.mxu0 0.0
        %2041 = vmatpush1.msra.mxu0 0.0
        %2042 = vmatprep.subr.mxu0 0.0
        %2043 = vmatpush1.msra.mxu0 0.0
        %2044 = vmatprep.subr.mxu0 0.0
        %2045 = vmatpush1.msra.mxu0 0.0
        %2046 = vmatprep.subr.mxu0 0.0
        %2047 = vmatpush1.msra.mxu0 0.0
        %2048 = vmatprep.subr.mxu0 0.0
        %2049 = vmatpush1.msra.mxu0 0.0
        %2050 = vmatprep.subr.mxu0 0.0
        %2051 = vmatpush1.msra.mxu0 0.0
        %2052 = vmatprep.subr.mxu0 0.0
        %2053 = vmatpush1.msra.mxu0 0.0
        %2054 = vmatprep.subr.mxu0 0.0
        %2055 = vmatpush1.msra.mxu0 0.0
        %2056 = vmatprep.subr.mxu0 0.0
        %2057 = vmatpush1.msra.mxu0 0.0
        %2058 = vmatprep.subr.mxu0 0.0
        %2059 = vmatpush1.msra.mxu0 0.0
        %2060 = vmatprep.mubr.f32.mxu0 0.0
        %2061 = vmatmul.mubr.f32.gmra.mrb[0].mxu0 %v1994
        %v2062 = vpop.f32.mrb[0].mxu0
        %v2063 = vadd.f32 0.0, %v2062
        %v2064 = vpop.f32.mrb[0].mxu0
        %2065 = vdwg.mxu0
        %v2066 = vsel %vm457, %v1844, 0.0
        %v2067 = vsel %vm457, %v1917, 0.0
        %v2068 = vadd.f32 %v2066, %v2067
        %v2069 = vsel %vm457, %v1990, 0.0
        %v2070 = vadd.f32 %v2068, %v2069
        %v2071 = vsel %vm457, %v2063, 0.0
        %v2072 = vadd.f32 %v2070, %v2071
        %v2073 = vld [vmem:[%s7] sm:$0x1]
        %v2075 = vlaneseq
        %v2076 = vshrl.u32 %v2075, 7
        %v2077 = vsub.s32 0, %v2076
        %v2078 = vrot.slane %v2073, %v2077
        %v2080 = vadd.f32 %v2072, %v2078
        %2081 = vst.msk [vmem:[%s449] sm:$0xff] %vm457, %v2080
        %s2082 = sand.u32 %s221, 1
        %s2083 = scalar_lea.sflag [#allocation4], %s2082
        %s2084 = sand.u32 %s221, 1
        %s2085 = smul.addr %s2084, 8
        %s2086 = scalar_lea.vmem [#allocation14], %s2085
        // Predicated region
        $region81: #{tpu_custom_call.1} parent=51 // pred_check
          %p2087 = pneg %p231
        $region82: #{tpu_custom_call.1} parent=51 // pred_check_branch
          %2089 = sbr.rel (%p2087) target = $region84
        $region83: #{tpu_custom_call.1} parent=51 // pred_region
          %s2091 = ssub.s32 128, 128
          %2092 = vsyncadd %s2083, %s2091
          %s2093 = smul.addr %s30, 128
          %s2094 = scalar_lea.hbm %s8, %s2093
          %s2096 = sshll.u32 %s2086, 4
          %s2097 = int_to_ptr.vmem [resolvable:$true] %s2096
          %2099 = dma.vmem_to_hbm [thread:$0]  %s2097, 128, %s2094, %s2083
        $region84: #{tpu_custom_call.1} parent=51 // pred_fallthru
          _
      $region52: #{tpu_custom_call.1} parent=5 // pred_fallthru
        _
      %p2100 = scmp.le.s32.totalorder 2, %s25
      // Predicated region
      $region85: #{tpu_custom_call.1} parent=5 // pred_check
        %p2101 = pneg %p2100
      $region86: #{tpu_custom_call.1} parent=5 // pred_check_branch
        %2103 = sbr.rel (%p2101) target = $region88
      $region87: #{tpu_custom_call.1} parent=5 // pred_region
        %s2104 = ssub.s32 %s25, 2
        // Predicated region
        $region89: #{tpu_custom_call.1} parent=87 // pred_check
          %p2105 = pneg %p237
        $region90: #{tpu_custom_call.1} parent=87 // pred_check_branch
          %2107 = sbr.rel (%p2105) target = $region92
        $region91: #{tpu_custom_call.1} parent=87 // pred_region
          %s2108 = sand.u32 %s222, 1
          %s2109 = scalar_lea.sflag [#allocation4], %s2108
          %s2110 = sand.u32 %s222, 1
          %s2111 = smul.addr %s2110, 8
          %s2112 = scalar_lea.vmem [#allocation14], %s2111
          %2113 = dma.done %s2109, 128
        $region92: #{tpu_custom_call.1} parent=87 // pred_fallthru
          _
      $region88: #{tpu_custom_call.1} parent=5 // pred_fallthru
        _
    $region6: #{tpu_custom_call.1} parent=1 // loop_footer
      %s29 = sadd.s32 1, %s25
    $region7: #{tpu_custom_call.1} parent=1 // loop_footer_branch
      %24 = sbr.rel target = $region3
    $region8: #{tpu_custom_call.1} parent=1 // loop_exit
      _
    %2114 = vsyncpa [#allocation3], 1
    %s2115 = scalar_lea.sflag [#allocation3], 1
    %2116 = vsyncpa %s2115, 1
    %2117 = vsyncpa [#allocation6], 1
    %s2118 = scalar_lea.sflag [#allocation6], 1
    %2119 = vsyncpa %s2118, 1
    %2120 = vsyncpa [#allocation9], 1
    %2121 = vsyncpa [#allocation12], 1
    %2122 = vsyncpa [#allocation4], 1
    %s2123 = scalar_lea.sflag [#allocation4], 1
    %2124 = vsyncpa %s2123, 1

</llo_original>
